<compile_context>
chip_gen: v7x
topology: tpu7x:2x2x1
jax: 0.10.0
libtpu: 0.0.40
codegen_flags: <defaults>
</compile_context>

<pallas_src>
import functools
import math

import jax
import jax.numpy as jnp
from jax.experimental import pallas as pl
from jax.experimental.pallas import tpu as pltpu

LN_EPS = 1e-12  # BERT layer_norm_eps


def _layer_norm(x, gamma, beta):
    # f32 LayerNorm (kept in f32 on all chips; v5e has no bf16 VPU/EUP).
    mean = jnp.mean(x, axis=-1, keepdims=True)
    var = jnp.mean(jnp.square(x - mean), axis=-1, keepdims=True)
    return (x - mean) * jax.lax.rsqrt(var + LN_EPS) * gamma + beta


def _nbytes(a):
    return math.prod(a.shape) * jnp.dtype(a.dtype).itemsize


# ---------------- fused encoder kernel ----------------

def _fused_encoder_kernel(emb_ref, mask_ref, eg_ref, eb_ref,
                          wqkv_ref, bqkv_ref,
                          wao_ref, bao_ref, ln1g_ref, ln1b_ref,
                          wi_ref, bi_ref, wo_ref, bo_ref, ln2g_ref, ln2b_ref,
                          pw_ref, pb_ref,
                          hid_ref, pooled_ref, *, num_heads, head_dim):
    l = pl.program_id(1)
    nh, hd = num_heads, head_dim
    H = nh * hd

    # Layer 0: fuse the embeddings LayerNorm; hid_ref is the carried hidden
    # state (output-resident across the layer grid axis).
    @pl.when(l == 0)
    def _():
        hid_ref[0] = _layer_norm(emb_ref[0], eg_ref[...], eb_ref[...])

    x = hid_ref[0]                       # (S, H) f32 carry
    mask = mask_ref[0]                   # (1, S) additive mask (0 / -10000), f32
    xb = x.astype(jnp.bfloat16)          # bf16 matmul inputs, f32 accumulation

    # Fused QKV projection: one (S,H) @ (H,3H) matmul, f32 accumulation.
    qkv = jnp.dot(xb, wqkv_ref[0], preferred_element_type=jnp.float32) + bqkv_ref[0]
    # Scale q once (O(S*H)) instead of scaling the (S,S) scores per head.
    q = (qkv[:, 0:H] * (1.0 / math.sqrt(hd))).astype(jnp.bfloat16)
    k = qkv[:, H:2 * H].astype(jnp.bfloat16)
    v = qkv[:, 2 * H:3 * H].astype(jnp.bfloat16)

    def split_heads(t):
        # (S, H) bf16 -> (nh, S, hd) bf16.  Lane slices + leading-axis stack.
        # TODO(synk): with real head_dim (>=128 lanes, H multiple of 128) a
        # single lane-dense reshape/einshape is preferable to per-head slices.
        return jnp.stack([t[:, h * hd:(h + 1) * hd] for h in range(nh)], axis=0)

    # Batched-over-heads attention: one score matmul, one softmax, one
    # context matmul for all heads.
    s = jnp.einsum('hqd,hkd->hqk', split_heads(q), split_heads(k),
                   preferred_element_type=jnp.float32)        # (nh, S, S) f32
    s = s + mask[None]                                        # mask add in f32
    s = s - jnp.max(s, axis=-1, keepdims=True)
    p = jnp.exp(s)
    p = p * pl.reciprocal(jnp.sum(p, axis=-1, keepdims=True), approx=True)
    ctx_h = jnp.einsum('hqk,hkd->hqd', p.astype(jnp.bfloat16), split_heads(v),
                       preferred_element_type=jnp.float32)    # (nh, S, hd)
    ctx = jnp.concatenate([ctx_h[h] for h in range(nh)], axis=-1)  # (S, H)

    attn_out = jnp.dot(ctx.astype(jnp.bfloat16), wao_ref[0],
                       preferred_element_type=jnp.float32) + bao_ref[0]
    h1 = _layer_norm(x + attn_out, ln1g_ref[0], ln1b_ref[0])

    # TODO(synk): HF BERT 'gelu' is erf-based; tanh approximation used here.
    # TODO(synk): at real BERT sizes on v7x, tile the FFN matmuls over the
    # intermediate dim instead of keeping full wi/wo blocks resident.
    inter = jax.nn.gelu(
        jnp.dot(h1.astype(jnp.bfloat16), wi_ref[0],
                preferred_element_type=jnp.float32) + bi_ref[0],
        approximate=True)
    ffn = jnp.dot(inter.astype(jnp.bfloat16), wo_ref[0],
                  preferred_element_type=jnp.float32) + bo_ref[0]
    out_x = _layer_norm(h1 + ffn, ln2g_ref[0], ln2b_ref[0])
    hid_ref[0] = out_x

    # Last layer: fuse the pooler (tanh(CLS @ Wp + bp)).
    @pl.when(l == pl.num_programs(1) - 1)
    def _():
        cls = out_x[0:1, :]                                    # (1, H) CLS row
        pooled_ref[0] = jnp.tanh(
            jnp.dot(cls.astype(jnp.bfloat16), pw_ref[...],
                    preferred_element_type=jnp.float32) + pb_ref[...])


# ---------------- pallas_call wrapper ----------------

_LAYER_KEYS = ('wqkv', 'bqkv', 'wao', 'bao',
               'ln1g', 'ln1b', 'wi', 'bi', 'wo', 'bo', 'ln2g', 'ln2b')


def fused_encoder(emb, ext_mask, lp, emb_ln_g, emb_ln_b, pool_w, pool_b,
                  num_heads):
    B, S, H = emb.shape
    L = lp['wqkv'].shape[0]
    head_dim = H // num_heads
    kernel = functools.partial(_fused_encoder_kernel,
                               num_heads=num_heads, head_dim=head_dim)

    def layer_spec(arr):
        nd = arr.ndim
        return pl.BlockSpec((1,) + arr.shape[1:],
                            lambda b, l: (l,) + (0,) * (nd - 1))

    def const_spec(arr):
        nd = arr.ndim
        return pl.BlockSpec(arr.shape, lambda b, l: (0,) * nd)

    in_specs = ([pl.BlockSpec((1, S, H), lambda b, l: (b, 0, 0)),   # embeddings
                 pl.BlockSpec((1, 1, S), lambda b, l: (b, 0, 0)),   # additive mask
                 const_spec(emb_ln_g), const_spec(emb_ln_b)]
                + [layer_spec(lp[k]) for k in _LAYER_KEYS]
                + [const_spec(pool_w), const_spec(pool_b)])

    out_specs = (pl.BlockSpec((1, S, H), lambda b, l: (b, 0, 0)),   # last_hidden
                 pl.BlockSpec((1, 1, H), lambda b, l: (b, 0, 0)))   # pooled
    out_shape = (jax.ShapeDtypeStruct((B, S, H), jnp.float32),
                 jax.ShapeDtypeStruct((B, 1, H), jnp.float32))

    # Explicit VMEM budget: 2x (double-buffered) per-step blocks + headroom.
    per_step = (_nbytes(emb) // B + _nbytes(ext_mask) // B
                + _nbytes(emb_ln_g) + _nbytes(emb_ln_b)
                + _nbytes(pool_w) + _nbytes(pool_b)
                + sum(_nbytes(lp[k]) // L for k in _LAYER_KEYS)
                + S * H * 4 + H * 4)
    vmem_limit = int(min(2 * per_step + (8 << 20), 56 << 20))

    return pl.pallas_call(
        kernel,
        out_shape=out_shape,
        grid=(B, L),
        in_specs=in_specs,
        out_specs=out_specs,
        compiler_params=pltpu.CompilerParams(
            dimension_semantics=("parallel", "arbitrary"),
            vmem_limit_bytes=vmem_limit),
    )(emb, ext_mask, emb_ln_g, emb_ln_b,
      *[lp[k] for k in _LAYER_KEYS],
      pool_w, pool_b)


# ---------------- parameter init (synthetic, deterministic) ----------------

def init_params(key, vocab_size, hidden, num_layers, intermediate, max_pos,
                type_vocab=2):
    ks = iter(jax.random.split(key, 10))
    L, H, I = num_layers, hidden, intermediate

    def nrm(shape, dtype=jnp.float32):
        return (0.02 * jax.random.normal(next(ks), shape, jnp.float32)).astype(dtype)

    # Per-layer weights stacked along a leading L axis; matmul weights in bf16.
    # Q/K/V projections are pre-fused into one (H, 3H) weight per layer.
    layers = {
        'wqkv': nrm((L, H, 3 * H), jnp.bfloat16),
        'bqkv': jnp.zeros((L, 1, 3 * H), jnp.float32),
        'wao': nrm((L, H, H), jnp.bfloat16), 'bao': jnp.zeros((L, 1, H), jnp.float32),
        'ln1g': jnp.ones((L, 1, H), jnp.float32),
        'ln1b': jnp.zeros((L, 1, H), jnp.float32),
        'wi': nrm((L, H, I), jnp.bfloat16), 'bi': jnp.zeros((L, 1, I), jnp.float32),
        'wo': nrm((L, I, H), jnp.bfloat16), 'bo': jnp.zeros((L, 1, H), jnp.float32),
        'ln2g': jnp.ones((L, 1, H), jnp.float32),
        'ln2b': jnp.zeros((L, 1, H), jnp.float32),
    }
    return {
        'word_emb': nrm((vocab_size, H)),   # resize_token_embeddings -> len_tokenizer rows
        'pos_emb': nrm((max_pos, H)),
        'type_emb': nrm((type_vocab, H)),
        'emb_ln_g': jnp.ones((1, H), jnp.float32),
        'emb_ln_b': jnp.zeros((1, H), jnp.float32),
        'pool_w': nrm((H, H), jnp.bfloat16),
        'pool_b': jnp.zeros((1, H), jnp.float32),
        'layers': layers,
    }


# ---------------- full BaseEncoder.forward ----------------

def base_encoder_forward(params, input_ids, attention_mask, num_heads):
    B, S = input_ids.shape
    # Embeddings: word + position + token_type(=0).  Gather is glue -> plain JAX.
    word = jnp.take(params['word_emb'], input_ids, axis=0)          # (B, S, H)
    pos = params['pos_emb'][:S][None, :, :]                         # (1, S, H)
    typ = params['type_emb'][0][None, None, :]                      # (1, 1, H)
    emb = (word + pos + typ).astype(jnp.float32)

    # HF extended attention mask: (1 - mask) * -10000, broadcast over queries.
    ext_mask = (1.0 - attention_mask.astype(jnp.float32))[:, None, :] * -10000.0

    hid, pooled = fused_encoder(emb, ext_mask, params['layers'],
                                params['emb_ln_g'], params['emb_ln_b'],
                                params['pool_w'], params['pool_b'], num_heads)
    return hid, pooled[:, 0, :]   # (last_hidden_state, pooler_output)


if __name__ == "__main__":
    # Small TinyBERT-like config: 4 layers, small hidden.
    B, S, H, NUM_HEADS, NUM_LAYERS, INTER = 2, 8, 32, 2, 4, 64
    LEN_TOKENIZER, MAX_POS = 50, 16

    key = jax.random.PRNGKey(0)
    pkey, ikey = jax.random.split(key)
    params = init_params(pkey, LEN_TOKENIZER, H, NUM_LAYERS, INTER, MAX_POS)

    input_ids = jax.random.randint(ikey, (B, S), 0, LEN_TOKENIZER, dtype=jnp.int32)
    attention_mask = jnp.ones((B, S), jnp.int32).at[1, 6:].set(0)  # 2nd example padded

    fwd = jax.jit(base_encoder_forward, static_argnames=("num_heads",))
    last_hidden, pooled = fwd(params, input_ids, attention_mask,
                              num_heads=NUM_HEADS)
    jax.block_until_ready((last_hidden, pooled))

    assert last_hidden.shape == (B, S, H) and pooled.shape == (B, H)
    assert bool(jnp.all(jnp.isfinite(last_hidden))) and bool(jnp.all(jnp.isfinite(pooled)))
    print("KERNEL_OK")
</pallas_src>

<mosaic_0001>
module attributes {stable_mosaic.version = 11 : i64} {
  func.func @_fused_encoder_kernel(%arg0: i32, %arg1: i32, %arg2: memref<1x8x32xf32, #tpu.memory_space<vmem>>, %arg3: memref<1x1x8xf32, #tpu.memory_space<vmem>>, %arg4: memref<1x32xf32, #tpu.memory_space<vmem>>, %arg5: memref<1x32xf32, #tpu.memory_space<vmem>>, %arg6: memref<1x32x96xbf16, #tpu.memory_space<vmem>>, %arg7: memref<1x1x96xf32, #tpu.memory_space<vmem>>, %arg8: memref<1x32x32xbf16, #tpu.memory_space<vmem>>, %arg9: memref<1x1x32xf32, #tpu.memory_space<vmem>>, %arg10: memref<1x1x32xf32, #tpu.memory_space<vmem>>, %arg11: memref<1x1x32xf32, #tpu.memory_space<vmem>>, %arg12: memref<1x32x64xbf16, #tpu.memory_space<vmem>>, %arg13: memref<1x1x64xf32, #tpu.memory_space<vmem>>, %arg14: memref<1x64x32xbf16, #tpu.memory_space<vmem>>, %arg15: memref<1x1x32xf32, #tpu.memory_space<vmem>>, %arg16: memref<1x1x32xf32, #tpu.memory_space<vmem>>, %arg17: memref<1x1x32xf32, #tpu.memory_space<vmem>>, %arg18: memref<32x32xbf16, #tpu.memory_space<vmem>>, %arg19: memref<1x32xf32, #tpu.memory_space<vmem>>, %arg20: memref<1x8x32xf32, #tpu.memory_space<vmem>>, %arg21: memref<1x1x32xf32, #tpu.memory_space<vmem>>) attributes {dimension_semantics = [#tpu.dimension_semantics<parallel>, #tpu.dimension_semantics<arbitrary>], iteration_bounds = array<i64: 2, 4>, scalar_prefetch = 0 : i64, scratch_operands = 0 : i64, tpu.core_type = #tpu.core_type<tc>, window_params = [{transform_indices = @transform_0, window_bounds = array<i64: 1, 8, 32>}, {transform_indices = @transform_1, window_bounds = array<i64: 1, 1, 8>}, {pipeline_mode = #tpu.pipeline_mode<synchronous>, transform_indices = @transform_2, window_bounds = array<i64: 1, 32>}, {pipeline_mode = #tpu.pipeline_mode<synchronous>, transform_indices = @transform_3, window_bounds = array<i64: 1, 32>}, {transform_indices = @transform_4, window_bounds = array<i64: 1, 32, 96>}, {transform_indices = @transform_5, window_bounds = array<i64: 1, 1, 96>}, {transform_indices = @transform_6, window_bounds = array<i64: 1, 32, 32>}, {transform_indices = @transform_7, window_bounds = array<i64: 1, 1, 32>}, {transform_indices = @transform_8, window_bounds = array<i64: 1, 1, 32>}, {transform_indices = @transform_9, window_bounds = array<i64: 1, 1, 32>}, {transform_indices = @transform_10, window_bounds = array<i64: 1, 32, 64>}, {transform_indices = @transform_11, window_bounds = array<i64: 1, 1, 64>}, {transform_indices = @transform_12, window_bounds = array<i64: 1, 64, 32>}, {transform_indices = @transform_13, window_bounds = array<i64: 1, 1, 32>}, {transform_indices = @transform_14, window_bounds = array<i64: 1, 1, 32>}, {transform_indices = @transform_15, window_bounds = array<i64: 1, 1, 32>}, {pipeline_mode = #tpu.pipeline_mode<synchronous>, transform_indices = @transform_16, window_bounds = array<i64: 32, 32>}, {pipeline_mode = #tpu.pipeline_mode<synchronous>, transform_indices = @transform_17, window_bounds = array<i64: 1, 32>}, {transform_indices = @transform_18, window_bounds = array<i64: 1, 8, 32>}, {transform_indices = @transform_19, window_bounds = array<i64: 1, 1, 32>}]} {
    %c0_i32 = arith.constant 0 : i32
    %0 = arith.cmpi eq, %arg1, %c0_i32 : i32
    %1 = arith.extui %0 : i1 to i32
    %c0_i32_0 = arith.constant 0 : i32
    %2 = arith.cmpi ne, %1, %c0_i32_0 : i32
    scf.if %2 {
      %c0_68 = arith.constant 0 : index
      %c0_69 = arith.constant 0 : index
      %c0_70 = arith.constant 0 : index
      %156 = vector.load %arg2[%c0_68, %c0_69, %c0_70] : memref<1x8x32xf32, #tpu.memory_space<vmem>>, vector<1x8x32xf32>
      %157 = vector.shape_cast %156 : vector<1x8x32xf32> to vector<8x32xf32>
      %c0_71 = arith.constant 0 : index
      %c0_72 = arith.constant 0 : index
      %158 = vector.load %arg4[%c0_71, %c0_72] : memref<1x32xf32, #tpu.memory_space<vmem>>, vector<1x32xf32>
      %c0_73 = arith.constant 0 : index
      %c0_74 = arith.constant 0 : index
      %159 = vector.load %arg5[%c0_73, %c0_74] : memref<1x32xf32, #tpu.memory_space<vmem>>, vector<1x32xf32>
      %cst_75 = arith.constant dense<0.000000e+00> : vector<8xf32>
      %160 = vector.multi_reduction <add>, %157, %cst_75 [1] : vector<8x32xf32> to vector<8xf32>
      %161 = vector.shape_cast %160 : vector<8xf32> to vector<8x1xf32>
      %cst_76 = arith.constant 3.200000e+01 : f32
      %162 = vector.broadcast %cst_76 : f32 to vector<8x1xf32>
      %163 = arith.divf %161, %162 : vector<8x1xf32>
      %164 = vector.broadcast %163 : vector<8x1xf32> to vector<8x32xf32>
      %165 = arith.subf %157, %164 : vector<8x32xf32>
      %166 = arith.mulf %165, %165 : vector<8x32xf32>
      %cst_77 = arith.constant dense<0.000000e+00> : vector<8xf32>
      %167 = vector.multi_reduction <add>, %166, %cst_77 [1] : vector<8x32xf32> to vector<8xf32>
      %168 = vector.shape_cast %167 : vector<8xf32> to vector<8x1xf32>
      %cst_78 = arith.constant 3.200000e+01 : f32
      %169 = vector.broadcast %cst_78 : f32 to vector<8x1xf32>
      %170 = arith.divf %168, %169 : vector<8x1xf32>
      %171 = vector.broadcast %163 : vector<8x1xf32> to vector<8x32xf32>
      %172 = arith.subf %157, %171 : vector<8x32xf32>
      %cst_79 = arith.constant 9.99999996E-13 : f32
      %173 = vector.broadcast %cst_79 : f32 to vector<8x1xf32>
      %174 = arith.addf %170, %173 : vector<8x1xf32>
      %175 = math.rsqrt %174 : vector<8x1xf32>
      %176 = vector.broadcast %175 : vector<8x1xf32> to vector<8x32xf32>
      %177 = arith.mulf %172, %176 : vector<8x32xf32>
      %178 = vector.broadcast %158 : vector<1x32xf32> to vector<8x32xf32>
      %179 = arith.mulf %177, %178 : vector<8x32xf32>
      %180 = vector.broadcast %159 : vector<1x32xf32> to vector<8x32xf32>
      %181 = arith.addf %179, %180 : vector<8x32xf32>
      %c0_80 = arith.constant 0 : index
      %c0_81 = arith.constant 0 : index
      %c0_82 = arith.constant 0 : index
      %182 = vector.load %arg20[%c0_80, %c0_81, %c0_82] : memref<1x8x32xf32, #tpu.memory_space<vmem>>, vector<1x8x32xf32>
      %183 = vector.shape_cast %182 : vector<1x8x32xf32> to vector<8x32xf32>
      %184 = vector.shape_cast %181 : vector<8x32xf32> to vector<1x8x32xf32>
      tpu.vector_store %arg20[%c0_80, %c0_81, %c0_82], %184 {strides = array<i32>} : memref<1x8x32xf32, #tpu.memory_space<vmem>>, vector<1x8x32xf32>,
    } else {
    }
    %c0 = arith.constant 0 : index
    %c0_1 = arith.constant 0 : index
    %c0_2 = arith.constant 0 : index
    %3 = vector.load %arg20[%c0, %c0_1, %c0_2] : memref<1x8x32xf32, #tpu.memory_space<vmem>>, vector<1x8x32xf32>
    %4 = vector.shape_cast %3 : vector<1x8x32xf32> to vector<8x32xf32>
    %c0_3 = arith.constant 0 : index
    %c0_4 = arith.constant 0 : index
    %c0_5 = arith.constant 0 : index
    %5 = vector.load %arg3[%c0_3, %c0_4, %c0_5] : memref<1x1x8xf32, #tpu.memory_space<vmem>>, vector<1x1x8xf32>
    %6 = vector.shape_cast %5 : vector<1x1x8xf32> to vector<1x8xf32>
    %7 = arith.truncf %4 : vector<8x32xf32> to vector<8x32xbf16>
    %c0_6 = arith.constant 0 : index
    %c0_7 = arith.constant 0 : index
    %c0_8 = arith.constant 0 : index
    %8 = vector.load %arg6[%c0_6, %c0_7, %c0_8] : memref<1x32x96xbf16, #tpu.memory_space<vmem>>, vector<1x32x96xbf16>
    %9 = vector.shape_cast %8 : vector<1x32x96xbf16> to vector<32x96xbf16>
    %cst = arith.constant dense<0.000000e+00> : vector<8x96xf32>
    %10 = tpu.matmul %7, %9, %cst {dimension_numbers = #tpu.dot_dimension_numbers<[1], [0], [0], [1], [0, 0, 1, 1], [], []>} : vector<8x32xbf16>, vector<32x96xbf16>, vector<8x96xf32> -> vector<8x96xf32>
    %c0_9 = arith.constant 0 : index
    %c0_10 = arith.constant 0 : index
    %c0_11 = arith.constant 0 : index
    %11 = vector.load %arg7[%c0_9, %c0_10, %c0_11] : memref<1x1x96xf32, #tpu.memory_space<vmem>>, vector<1x1x96xf32>
    %12 = vector.shape_cast %11 : vector<1x1x96xf32> to vector<1x96xf32>
    %13 = vector.broadcast %12 : vector<1x96xf32> to vector<8x96xf32>
    %14 = arith.addf %10, %13 : vector<8x96xf32>
    %15 = vector.extract_strided_slice %14 {offsets = [0, 0], sizes = [8, 32], strides = [1, 1]} : vector<8x96xf32> to vector<8x32xf32>
    %cst_12 = arith.constant 2.500000e-01 : f32
    %16 = vector.broadcast %cst_12 : f32 to vector<8x32xf32>
    %17 = arith.mulf %15, %16 : vector<8x32xf32>
    %18 = arith.truncf %17 : vector<8x32xf32> to vector<8x32xbf16>
    %19 = vector.extract_strided_slice %14 {offsets = [0, 32], sizes = [8, 32], strides = [1, 1]} : vector<8x96xf32> to vector<8x32xf32>
    %20 = arith.truncf %19 : vector<8x32xf32> to vector<8x32xbf16>
    %21 = vector.extract_strided_slice %14 {offsets = [0, 64], sizes = [8, 32], strides = [1, 1]} : vector<8x96xf32> to vector<8x32xf32>
    %22 = arith.truncf %21 : vector<8x32xf32> to vector<8x32xbf16>
    %23 = vector.extract_strided_slice %18 {offsets = [0, 0], sizes = [8, 16], strides = [1, 1]} : vector<8x32xbf16> to vector<8x16xbf16>
    %24 = vector.extract_strided_slice %18 {offsets = [0, 16], sizes = [8, 16], strides = [1, 1]} : vector<8x32xbf16> to vector<8x16xbf16>
    %25 = vector.shape_cast %23 : vector<8x16xbf16> to vector<1x8x16xbf16>
    %26 = vector.shape_cast %24 : vector<8x16xbf16> to vector<1x8x16xbf16>
    %27 = tpu.concatenate %25, %26 in 0 : vector<1x8x16xbf16>, vector<1x8x16xbf16> -> vector<2x8x16xbf16>
    %28 = vector.extract_strided_slice %20 {offsets = [0, 0], sizes = [8, 16], strides = [1, 1]} : vector<8x32xbf16> to vector<8x16xbf16>
    %29 = vector.extract_strided_slice %20 {offsets = [0, 16], sizes = [8, 16], strides = [1, 1]} : vector<8x32xbf16> to vector<8x16xbf16>
    %30 = vector.shape_cast %28 : vector<8x16xbf16> to vector<1x8x16xbf16>
    %31 = vector.shape_cast %29 : vector<8x16xbf16> to vector<1x8x16xbf16>
    %32 = tpu.concatenate %30, %31 in 0 : vector<1x8x16xbf16>, vector<1x8x16xbf16> -> vector<2x8x16xbf16>
    "tpu.trace_start"() <{level = 10 : i32, message = "hqd,hkd->hqk"}> : () -> ()
    %cst_13 = arith.constant dense<0.000000e+00> : vector<2x8x8xf32>
    %33 = tpu.matmul %27, %32, %cst_13 {dimension_numbers = #tpu.dot_dimension_numbers<[2], [2], [1], [1], [0, 0, 0, 1, 1, 1], [0], [0]>} : vector<2x8x16xbf16>, vector<2x8x16xbf16>, vector<2x8x8xf32> -> vector<2x8x8xf32>
    "tpu.trace_stop"() : () -> ()
    %34 = vector.shape_cast %6 : vector<1x8xf32> to vector<1x1x8xf32>
    %35 = vector.broadcast %34 : vector<1x1x8xf32> to vector<2x8x8xf32>
    %36 = arith.addf %33, %35 : vector<2x8x8xf32>
    %cst_14 = arith.constant dense<0xFF800000> : vector<2x8xf32>
    %37 = vector.multi_reduction <maximumf>, %36, %cst_14 [2] : vector<2x8x8xf32> to vector<2x8xf32>
    %38 = vector.shape_cast %37 : vector<2x8xf32> to vector<2x8x1xf32>
    %39 = vector.broadcast %38 : vector<2x8x1xf32> to vector<2x8x8xf32>
    %40 = arith.subf %36, %39 : vector<2x8x8xf32>
    %41 = math.exp %40 : vector<2x8x8xf32>
    %cst_15 = arith.constant dense<0.000000e+00> : vector<2x8xf32>
    %42 = vector.multi_reduction <add>, %41, %cst_15 [2] : vector<2x8x8xf32> to vector<2x8xf32>
    %43 = vector.shape_cast %42 : vector<2x8xf32> to vector<2x8x1xf32>
    %44 = tpu.reciprocal %43 {approx = true} : vector<2x8x1xf32> -> vector<2x8x1xf32>
    %45 = vector.broadcast %44 : vector<2x8x1xf32> to vector<2x8x8xf32>
    %46 = arith.mulf %41, %45 : vector<2x8x8xf32>
    %47 = arith.truncf %46 : vector<2x8x8xf32> to vector<2x8x8xbf16>
    %48 = vector.extract_strided_slice %22 {offsets = [0, 0], sizes = [8, 16], strides = [1, 1]} : vector<8x32xbf16> to vector<8x16xbf16>
    %49 = vector.extract_strided_slice %22 {offsets = [0, 16], sizes = [8, 16], strides = [1, 1]} : vector<8x32xbf16> to vector<8x16xbf16>
    %50 = vector.shape_cast %48 : vector<8x16xbf16> to vector<1x8x16xbf16>
    %51 = vector.shape_cast %49 : vector<8x16xbf16> to vector<1x8x16xbf16>
    %52 = tpu.concatenate %50, %51 in 0 : vector<1x8x16xbf16>, vector<1x8x16xbf16> -> vector<2x8x16xbf16>
    "tpu.trace_start"() <{level = 10 : i32, message = "hqk,hkd->hqd"}> : () -> ()
    %cst_16 = arith.constant dense<0.000000e+00> : vector<2x8x16xf32>
    %53 = tpu.matmul %47, %52, %cst_16 {dimension_numbers = #tpu.dot_dimension_numbers<[2], [1], [1], [2], [0, 0, 0, 1, 1, 2], [0], [0]>} : vector<2x8x8xbf16>, vector<2x8x16xbf16>, vector<2x8x16xf32> -> vector<2x8x16xf32>
    "tpu.trace_stop"() : () -> ()
    %54 = vector.extract_strided_slice %53 {offsets = [0, 0, 0], sizes = [1, 8, 16], strides = [1, 1, 1]} : vector<2x8x16xf32> to vector<1x8x16xf32>
    %55 = vector.shape_cast %54 : vector<1x8x16xf32> to vector<8x16xf32>
    %56 = vector.extract_strided_slice %53 {offsets = [1, 0, 0], sizes = [1, 8, 16], strides = [1, 1, 1]} : vector<2x8x16xf32> to vector<1x8x16xf32>
    %57 = vector.shape_cast %56 : vector<1x8x16xf32> to vector<8x16xf32>
    %58 = tpu.concatenate %55, %57 in 1 : vector<8x16xf32>, vector<8x16xf32> -> vector<8x32xf32>
    %59 = arith.truncf %58 : vector<8x32xf32> to vector<8x32xbf16>
    %c0_17 = arith.constant 0 : index
    %c0_18 = arith.constant 0 : index
    %c0_19 = arith.constant 0 : index
    %60 = vector.load %arg8[%c0_17, %c0_18, %c0_19] : memref<1x32x32xbf16, #tpu.memory_space<vmem>>, vector<1x32x32xbf16>
    %61 = vector.shape_cast %60 : vector<1x32x32xbf16> to vector<32x32xbf16>
    %cst_20 = arith.constant dense<0.000000e+00> : vector<8x32xf32>
    %62 = tpu.matmul %59, %61, %cst_20 {dimension_numbers = #tpu.dot_dimension_numbers<[1], [0], [0], [1], [0, 0, 1, 1], [], []>} : vector<8x32xbf16>, vector<32x32xbf16>, vector<8x32xf32> -> vector<8x32xf32>
    %c0_21 = arith.constant 0 : index
    %c0_22 = arith.constant 0 : index
    %c0_23 = arith.constant 0 : index
    %63 = vector.load %arg9[%c0_21, %c0_22, %c0_23] : memref<1x1x32xf32, #tpu.memory_space<vmem>>, vector<1x1x32xf32>
    %64 = vector.shape_cast %63 : vector<1x1x32xf32> to vector<1x32xf32>
    %65 = vector.broadcast %64 : vector<1x32xf32> to vector<8x32xf32>
    %66 = arith.addf %62, %65 : vector<8x32xf32>
    %67 = arith.addf %4, %66 : vector<8x32xf32>
    %c0_24 = arith.constant 0 : index
    %c0_25 = arith.constant 0 : index
    %c0_26 = arith.constant 0 : index
    %68 = vector.load %arg10[%c0_24, %c0_25, %c0_26] : memref<1x1x32xf32, #tpu.memory_space<vmem>>, vector<1x1x32xf32>
    %69 = vector.shape_cast %68 : vector<1x1x32xf32> to vector<1x32xf32>
    %c0_27 = arith.constant 0 : index
    %c0_28 = arith.constant 0 : index
    %c0_29 = arith.constant 0 : index
    %70 = vector.load %arg11[%c0_27, %c0_28, %c0_29] : memref<1x1x32xf32, #tpu.memory_space<vmem>>, vector<1x1x32xf32>
    %71 = vector.shape_cast %70 : vector<1x1x32xf32> to vector<1x32xf32>
    %cst_30 = arith.constant dense<0.000000e+00> : vector<8xf32>
    %72 = vector.multi_reduction <add>, %67, %cst_30 [1] : vector<8x32xf32> to vector<8xf32>
    %73 = vector.shape_cast %72 : vector<8xf32> to vector<8x1xf32>
    %cst_31 = arith.constant 3.200000e+01 : f32
    %74 = vector.broadcast %cst_31 : f32 to vector<8x1xf32>
    %75 = arith.divf %73, %74 : vector<8x1xf32>
    %76 = vector.broadcast %75 : vector<8x1xf32> to vector<8x32xf32>
    %77 = arith.subf %67, %76 : vector<8x32xf32>
    %78 = arith.mulf %77, %77 : vector<8x32xf32>
    %cst_32 = arith.constant dense<0.000000e+00> : vector<8xf32>
    %79 = vector.multi_reduction <add>, %78, %cst_32 [1] : vector<8x32xf32> to vector<8xf32>
    %80 = vector.shape_cast %79 : vector<8xf32> to vector<8x1xf32>
    %cst_33 = arith.constant 3.200000e+01 : f32
    %81 = vector.broadcast %cst_33 : f32 to vector<8x1xf32>
    %82 = arith.divf %80, %81 : vector<8x1xf32>
    %83 = vector.broadcast %75 : vector<8x1xf32> to vector<8x32xf32>
    %84 = arith.subf %67, %83 : vector<8x32xf32>
    %cst_34 = arith.constant 9.99999996E-13 : f32
    %85 = vector.broadcast %cst_34 : f32 to vector<8x1xf32>
    %86 = arith.addf %82, %85 : vector<8x1xf32>
    %87 = math.rsqrt %86 : vector<8x1xf32>
    %88 = vector.broadcast %87 : vector<8x1xf32> to vector<8x32xf32>
    %89 = arith.mulf %84, %88 : vector<8x32xf32>
    %90 = vector.broadcast %69 : vector<1x32xf32> to vector<8x32xf32>
    %91 = arith.mulf %89, %90 : vector<8x32xf32>
    %92 = vector.broadcast %71 : vector<1x32xf32> to vector<8x32xf32>
    %93 = arith.addf %91, %92 : vector<8x32xf32>
    %94 = arith.truncf %93 : vector<8x32xf32> to vector<8x32xbf16>
    %c0_35 = arith.constant 0 : index
    %c0_36 = arith.constant 0 : index
    %c0_37 = arith.constant 0 : index
    %95 = vector.load %arg12[%c0_35, %c0_36, %c0_37] : memref<1x32x64xbf16, #tpu.memory_space<vmem>>, vector<1x32x64xbf16>
    %96 = vector.shape_cast %95 : vector<1x32x64xbf16> to vector<32x64xbf16>
    %cst_38 = arith.constant dense<0.000000e+00> : vector<8x64xf32>
    %97 = tpu.matmul %94, %96, %cst_38 {dimension_numbers = #tpu.dot_dimension_numbers<[1], [0], [0], [1], [0, 0, 1, 1], [], []>} : vector<8x32xbf16>, vector<32x64xbf16>, vector<8x64xf32> -> vector<8x64xf32>
    %c0_39 = arith.constant 0 : index
    %c0_40 = arith.constant 0 : index
    %c0_41 = arith.constant 0 : index
    %98 = vector.load %arg13[%c0_39, %c0_40, %c0_41] : memref<1x1x64xf32, #tpu.memory_space<vmem>>, vector<1x1x64xf32>
    %99 = vector.shape_cast %98 : vector<1x1x64xf32> to vector<1x64xf32>
    %100 = vector.broadcast %99 : vector<1x64xf32> to vector<8x64xf32>
    %101 = arith.addf %97, %100 : vector<8x64xf32>
    %102 = arith.mulf %101, %101 : vector<8x64xf32>
    %103 = arith.mulf %101, %102 : vector<8x64xf32>
    %cst_42 = arith.constant 4.471500e-02 : f32
    %104 = vector.broadcast %cst_42 : f32 to vector<8x64xf32>
    %105 = arith.mulf %104, %103 : vector<8x64xf32>
    %106 = arith.addf %101, %105 : vector<8x64xf32>
    %cst_43 = arith.constant 0.797884583 : f32
    %107 = vector.broadcast %cst_43 : f32 to vector<8x64xf32>
    %108 = arith.mulf %107, %106 : vector<8x64xf32>
    %109 = math.tanh %108 : vector<8x64xf32>
    %cst_44 = arith.constant 1.000000e+00 : f32
    %110 = vector.broadcast %cst_44 : f32 to vector<8x64xf32>
    %111 = arith.addf %110, %109 : vector<8x64xf32>
    %cst_45 = arith.constant 5.000000e-01 : f32
    %112 = vector.broadcast %cst_45 : f32 to vector<8x64xf32>
    %113 = arith.mulf %112, %111 : vector<8x64xf32>
    %114 = arith.mulf %101, %113 : vector<8x64xf32>
    %115 = arith.truncf %114 : vector<8x64xf32> to vector<8x64xbf16>
    %c0_46 = arith.constant 0 : index
    %c0_47 = arith.constant 0 : index
    %c0_48 = arith.constant 0 : index
    %116 = vector.load %arg14[%c0_46, %c0_47, %c0_48] : memref<1x64x32xbf16, #tpu.memory_space<vmem>>, vector<1x64x32xbf16>
    %117 = vector.shape_cast %116 : vector<1x64x32xbf16> to vector<64x32xbf16>
    %cst_49 = arith.constant dense<0.000000e+00> : vector<8x32xf32>
    %118 = tpu.matmul %115, %117, %cst_49 {dimension_numbers = #tpu.dot_dimension_numbers<[1], [0], [0], [1], [0, 0, 1, 1], [], []>} : vector<8x64xbf16>, vector<64x32xbf16>, vector<8x32xf32> -> vector<8x32xf32>
    %c0_50 = arith.constant 0 : index
    %c0_51 = arith.constant 0 : index
    %c0_52 = arith.constant 0 : index
    %119 = vector.load %arg15[%c0_50, %c0_51, %c0_52] : memref<1x1x32xf32, #tpu.memory_space<vmem>>, vector<1x1x32xf32>
    %120 = vector.shape_cast %119 : vector<1x1x32xf32> to vector<1x32xf32>
    %121 = vector.broadcast %120 : vector<1x32xf32> to vector<8x32xf32>
    %122 = arith.addf %118, %121 : vector<8x32xf32>
    %123 = arith.addf %93, %122 : vector<8x32xf32>
    %c0_53 = arith.constant 0 : index
    %c0_54 = arith.constant 0 : index
    %c0_55 = arith.constant 0 : index
    %124 = vector.load %arg16[%c0_53, %c0_54, %c0_55] : memref<1x1x32xf32, #tpu.memory_space<vmem>>, vector<1x1x32xf32>
    %125 = vector.shape_cast %124 : vector<1x1x32xf32> to vector<1x32xf32>
    %c0_56 = arith.constant 0 : index
    %c0_57 = arith.constant 0 : index
    %c0_58 = arith.constant 0 : index
    %126 = vector.load %arg17[%c0_56, %c0_57, %c0_58] : memref<1x1x32xf32, #tpu.memory_space<vmem>>, vector<1x1x32xf32>
    %127 = vector.shape_cast %126 : vector<1x1x32xf32> to vector<1x32xf32>
    %cst_59 = arith.constant dense<0.000000e+00> : vector<8xf32>
    %128 = vector.multi_reduction <add>, %123, %cst_59 [1] : vector<8x32xf32> to vector<8xf32>
    %129 = vector.shape_cast %128 : vector<8xf32> to vector<8x1xf32>
    %cst_60 = arith.constant 3.200000e+01 : f32
    %130 = vector.broadcast %cst_60 : f32 to vector<8x1xf32>
    %131 = arith.divf %129, %130 : vector<8x1xf32>
    %132 = vector.broadcast %131 : vector<8x1xf32> to vector<8x32xf32>
    %133 = arith.subf %123, %132 : vector<8x32xf32>
    %134 = arith.mulf %133, %133 : vector<8x32xf32>
    %cst_61 = arith.constant dense<0.000000e+00> : vector<8xf32>
    %135 = vector.multi_reduction <add>, %134, %cst_61 [1] : vector<8x32xf32> to vector<8xf32>
    %136 = vector.shape_cast %135 : vector<8xf32> to vector<8x1xf32>
    %cst_62 = arith.constant 3.200000e+01 : f32
    %137 = vector.broadcast %cst_62 : f32 to vector<8x1xf32>
    %138 = arith.divf %136, %137 : vector<8x1xf32>
    %139 = vector.broadcast %131 : vector<8x1xf32> to vector<8x32xf32>
    %140 = arith.subf %123, %139 : vector<8x32xf32>
    %cst_63 = arith.constant 9.99999996E-13 : f32
    %141 = vector.broadcast %cst_63 : f32 to vector<8x1xf32>
    %142 = arith.addf %138, %141 : vector<8x1xf32>
    %143 = math.rsqrt %142 : vector<8x1xf32>
    %144 = vector.broadcast %143 : vector<8x1xf32> to vector<8x32xf32>
    %145 = arith.mulf %140, %144 : vector<8x32xf32>
    %146 = vector.broadcast %125 : vector<1x32xf32> to vector<8x32xf32>
    %147 = arith.mulf %145, %146 : vector<8x32xf32>
    %148 = vector.broadcast %127 : vector<1x32xf32> to vector<8x32xf32>
    %149 = arith.addf %147, %148 : vector<8x32xf32>
    %c0_64 = arith.constant 0 : index
    %c0_65 = arith.constant 0 : index
    %c0_66 = arith.constant 0 : index
    %150 = vector.load %arg20[%c0_64, %c0_65, %c0_66] : memref<1x8x32xf32, #tpu.memory_space<vmem>>, vector<1x8x32xf32>
    %151 = vector.shape_cast %150 : vector<1x8x32xf32> to vector<8x32xf32>
    %152 = vector.shape_cast %149 : vector<8x32xf32> to vector<1x8x32xf32>
    tpu.vector_store %arg20[%c0_64, %c0_65, %c0_66], %152 {strides = array<i32>} : memref<1x8x32xf32, #tpu.memory_space<vmem>>, vector<1x8x32xf32>,
    %c3_i32 = arith.constant 3 : i32
    %153 = arith.cmpi eq, %arg1, %c3_i32 : i32
    %154 = arith.extui %153 : i1 to i32
    %c0_i32_67 = arith.constant 0 : i32
    %155 = arith.cmpi ne, %154, %c0_i32_67 : i32
    scf.if %155 {
      %156 = vector.extract_strided_slice %149 {offsets = [0, 0], sizes = [1, 32], strides = [1, 1]} : vector<8x32xf32> to vector<1x32xf32>
      %157 = arith.truncf %156 : vector<1x32xf32> to vector<1x32xbf16>
      %c0_68 = arith.constant 0 : index
      %c0_69 = arith.constant 0 : index
      %158 = vector.load %arg18[%c0_68, %c0_69] : memref<32x32xbf16, #tpu.memory_space<vmem>>, vector<32x32xbf16>
      %cst_70 = arith.constant dense<0.000000e+00> : vector<1x32xf32>
      %159 = tpu.matmul %157, %158, %cst_70 {dimension_numbers = #tpu.dot_dimension_numbers<[1], [0], [0], [1], [0, 0, 1, 1], [], []>} : vector<1x32xbf16>, vector<32x32xbf16>, vector<1x32xf32> -> vector<1x32xf32>
      %c0_71 = arith.constant 0 : index
      %c0_72 = arith.constant 0 : index
      %160 = vector.load %arg19[%c0_71, %c0_72] : memref<1x32xf32, #tpu.memory_space<vmem>>, vector<1x32xf32>
      %161 = arith.addf %159, %160 : vector<1x32xf32>
      %162 = math.tanh %161 : vector<1x32xf32>
      %c0_73 = arith.constant 0 : index
      %c0_74 = arith.constant 0 : index
      %c0_75 = arith.constant 0 : index
      %163 = vector.load %arg21[%c0_73, %c0_74, %c0_75] : memref<1x1x32xf32, #tpu.memory_space<vmem>>, vector<1x1x32xf32>
      %164 = vector.shape_cast %163 : vector<1x1x32xf32> to vector<1x32xf32>
      %165 = vector.shape_cast %162 : vector<1x32xf32> to vector<1x1x32xf32>
      tpu.vector_store %arg21[%c0_73, %c0_74, %c0_75], %165 {strides = array<i32>} : memref<1x1x32xf32, #tpu.memory_space<vmem>>, vector<1x1x32xf32>,
    } else {
    }
    return
  }
  func.func @transform_0(%arg0: i32, %arg1: i32) -> (i32, i32, i32) {
    %c0_i32 = arith.constant 0 : i32
    %c0_i32_0 = arith.constant 0 : i32
    %c0_i32_1 = arith.constant 0 : i32
    return %arg0, %c0_i32, %c0_i32_0 : i32, i32, i32
  }
  func.func @transform_1(%arg0: i32, %arg1: i32) -> (i32, i32, i32) {
    %c0_i32 = arith.constant 0 : i32
    %c0_i32_0 = arith.constant 0 : i32
    %c0_i32_1 = arith.constant 0 : i32
    return %arg0, %c0_i32, %c0_i32_0 : i32, i32, i32
  }
  func.func @transform_2(%arg0: i32, %arg1: i32) -> (i32, i32) {
    %c0_i32 = arith.constant 0 : i32
    %c0_i32_0 = arith.constant 0 : i32
    %c0_i32_1 = arith.constant 0 : i32
    return %c0_i32, %c0_i32_0 : i32, i32
  }
  func.func @transform_3(%arg0: i32, %arg1: i32) -> (i32, i32) {
    %c0_i32 = arith.constant 0 : i32
    %c0_i32_0 = arith.constant 0 : i32
    %c0_i32_1 = arith.constant 0 : i32
    return %c0_i32, %c0_i32_0 : i32, i32
  }
  func.func @transform_4(%arg0: i32, %arg1: i32) -> (i32, i32, i32) {
    %c0_i32 = arith.constant 0 : i32
    %c0_i32_0 = arith.constant 0 : i32
    %c0_i32_1 = arith.constant 0 : i32
    return %arg1, %c0_i32, %c0_i32_0 : i32, i32, i32
  }
  func.func @transform_5(%arg0: i32, %arg1: i32) -> (i32, i32, i32) {
    %c0_i32 = arith.constant 0 : i32
    %c0_i32_0 = arith.constant 0 : i32
    %c0_i32_1 = arith.constant 0 : i32
    return %arg1, %c0_i32, %c0_i32_0 : i32, i32, i32
  }
  func.func @transform_6(%arg0: i32, %arg1: i32) -> (i32, i32, i32) {
    %c0_i32 = arith.constant 0 : i32
    %c0_i32_0 = arith.constant 0 : i32
    %c0_i32_1 = arith.constant 0 : i32
    return %arg1, %c0_i32, %c0_i32_0 : i32, i32, i32
  }
  func.func @transform_7(%arg0: i32, %arg1: i32) -> (i32, i32, i32) {
    %c0_i32 = arith.constant 0 : i32
    %c0_i32_0 = arith.constant 0 : i32
    %c0_i32_1 = arith.constant 0 : i32
    return %arg1, %c0_i32, %c0_i32_0 : i32, i32, i32
  }
  func.func @transform_8(%arg0: i32, %arg1: i32) -> (i32, i32, i32) {
    %c0_i32 = arith.constant 0 : i32
    %c0_i32_0 = arith.constant 0 : i32
    %c0_i32_1 = arith.constant 0 : i32
    return %arg1, %c0_i32, %c0_i32_0 : i32, i32, i32
  }
  func.func @transform_9(%arg0: i32, %arg1: i32) -> (i32, i32, i32) {
    %c0_i32 = arith.constant 0 : i32
    %c0_i32_0 = arith.constant 0 : i32
    %c0_i32_1 = arith.constant 0 : i32
    return %arg1, %c0_i32, %c0_i32_0 : i32, i32, i32
  }
  func.func @transform_10(%arg0: i32, %arg1: i32) -> (i32, i32, i32) {
    %c0_i32 = arith.constant 0 : i32
    %c0_i32_0 = arith.constant 0 : i32
    %c0_i32_1 = arith.constant 0 : i32
    return %arg1, %c0_i32, %c0_i32_0 : i32, i32, i32
  }
  func.func @transform_11(%arg0: i32, %arg1: i32) -> (i32, i32, i32) {
    %c0_i32 = arith.constant 0 : i32
    %c0_i32_0 = arith.constant 0 : i32
    %c0_i32_1 = arith.constant 0 : i32
    return %arg1, %c0_i32, %c0_i32_0 : i32, i32, i32
  }
  func.func @transform_12(%arg0: i32, %arg1: i32) -> (i32, i32, i32) {
    %c0_i32 = arith.constant 0 : i32
    %c0_i32_0 = arith.constant 0 : i32
    %c0_i32_1 = arith.constant 0 : i32
    return %arg1, %c0_i32, %c0_i32_0 : i32, i32, i32
  }
  func.func @transform_13(%arg0: i32, %arg1: i32) -> (i32, i32, i32) {
    %c0_i32 = arith.constant 0 : i32
    %c0_i32_0 = arith.constant 0 : i32
    %c0_i32_1 = arith.constant 0 : i32
    return %arg1, %c0_i32, %c0_i32_0 : i32, i32, i32
  }
  func.func @transform_14(%arg0: i32, %arg1: i32) -> (i32, i32, i32) {
    %c0_i32 = arith.constant 0 : i32
    %c0_i32_0 = arith.constant 0 : i32
    %c0_i32_1 = arith.constant 0 : i32
    return %arg1, %c0_i32, %c0_i32_0 : i32, i32, i32
  }
  func.func @transform_15(%arg0: i32, %arg1: i32) -> (i32, i32, i32) {
    %c0_i32 = arith.constant 0 : i32
    %c0_i32_0 = arith.constant 0 : i32
    %c0_i32_1 = arith.constant 0 : i32
    return %arg1, %c0_i32, %c0_i32_0 : i32, i32, i32
  }
  func.func @transform_16(%arg0: i32, %arg1: i32) -> (i32, i32) {
    %c0_i32 = arith.constant 0 : i32
    %c0_i32_0 = arith.constant 0 : i32
    %c0_i32_1 = arith.constant 0 : i32
    return %c0_i32, %c0_i32_0 : i32, i32
  }
  func.func @transform_17(%arg0: i32, %arg1: i32) -> (i32, i32) {
    %c0_i32 = arith.constant 0 : i32
    %c0_i32_0 = arith.constant 0 : i32
    %c0_i32_1 = arith.constant 0 : i32
    return %c0_i32, %c0_i32_0 : i32, i32
  }
  func.func @transform_18(%arg0: i32, %arg1: i32) -> (i32, i32, i32) {
    %c0_i32 = arith.constant 0 : i32
    %c0_i32_0 = arith.constant 0 : i32
    %c0_i32_1 = arith.constant 0 : i32
    return %arg0, %c0_i32, %c0_i32_0 : i32, i32, i32
  }
  func.func @transform_19(%arg0: i32, %arg1: i32) -> (i32, i32, i32) {
    %c0_i32 = arith.constant 0 : i32
    %c0_i32_0 = arith.constant 0 : i32
    %c0_i32_1 = arith.constant 0 : i32
    return %arg0, %c0_i32, %c0_i32_0 : i32, i32, i32
  }
}

</mosaic_0001>

<llo_original>
// kernel: base_encoder_forward.1
$region0: #{base_encoder_forward.1}
  #allocation0 [shape = 'u32[]', space=smem, size = 0x4, offset = 0x4, fixed_abs, tag = 'smem constant byte address 0x4 - core index']
  #allocation1 [shape = 'u32[144,128]{1,0:T(1,128)}', space=vmem, size = 0x12000, scoped, tag = 'internal scratch']
  %s0 = inlined_call_operand.vmem [shape: f32[2,8,32], index: 0, kind: input, shape index: {}]
  %s1 = inlined_call_operand.vmem [shape: f32[2,1,8], index: 1, kind: input, shape index: {}]
  %s2 = inlined_call_operand.vmem [shape: f32[1,32], index: 2, kind: input, shape index: {}]
  %s3 = inlined_call_operand.vmem [shape: f32[1,32], index: 3, kind: input, shape index: {}]
  %s4 = inlined_call_operand.vmem [shape: bf16[4,32,96], index: 4, kind: input, shape index: {}]
  %s5 = inlined_call_operand.vmem [shape: f32[4,1,96], index: 5, kind: input, shape index: {}]
  %s6 = inlined_call_operand.vmem [shape: bf16[4,32,32], index: 6, kind: input, shape index: {}]
  %s7 = inlined_call_operand.vmem [shape: f32[4,1,32], index: 7, kind: input, shape index: {}]
  %s8 = inlined_call_operand.vmem [shape: f32[4,1,32], index: 8, kind: input, shape index: {}]
  %s9 = inlined_call_operand.vmem [shape: f32[4,1,32], index: 9, kind: input, shape index: {}]
  %s10 = inlined_call_operand.vmem [shape: bf16[4,32,64], index: 10, kind: input, shape index: {}]
  %s11 = inlined_call_operand.vmem [shape: f32[4,1,64], index: 11, kind: input, shape index: {}]
  %s12 = inlined_call_operand.vmem [shape: bf16[4,64,32], index: 12, kind: input, shape index: {}]
  %s13 = inlined_call_operand.vmem [shape: f32[4,1,32], index: 13, kind: input, shape index: {}]
  %s14 = inlined_call_operand.vmem [shape: f32[4,1,32], index: 14, kind: input, shape index: {}]
  %s15 = inlined_call_operand.vmem [shape: f32[4,1,32], index: 15, kind: input, shape index: {}]
  %s16 = inlined_call_operand.vmem [shape: bf16[32,32], index: 16, kind: input, shape index: {}]
  %s17 = inlined_call_operand.vmem [shape: f32[1,32], index: 17, kind: input, shape index: {}]
  %s18 = inlined_call_operand.hbm [shape: f32[2,8,32], index: 18, kind: output, shape index: {0}]
  %s19 = inlined_call_operand.hbm [shape: f32[2,1,32], index: 19, kind: output, shape index: {1}]
  %20 = xla_tuple %s18, %s19
  %s21 = sld [smem:[#allocation0]]
  $region121: #{base_encoder_forward.1} parent=0
    _
  %s23 = ssub.s32 1, %s21
  %s24 = scalar_select 0, %s23, %s21
  $region1: #{base_encoder_forward.1} parent=0
    #allocation2 [shape = 'u8[8192]{0}', space=vmem, size = 0x2000, scoped, tag = 'output window, operand 0']
    #allocation3 [shape = 's32[2]{0}', space=sflag, size = 0x8, scoped, tag = 'scoped memory for base_encoder_forward.1']
    #allocation4 [shape = 'u8[1024]{0}', space=vmem, size = 0x400, scoped, tag = 'output window, operand 1']
    #allocation5 [shape = 's32[2]{0}', space=sflag, size = 0x8, scoped, tag = 'scoped memory for base_encoder_forward.1']
    %25 = vsyncpa [#allocation3], 0
    %s26 = scalar_lea.sflag [#allocation3], 1
    %27 = vsyncpa %s26, 0
    %28 = vsyncpa [#allocation5], 0
    %s29 = scalar_lea.sflag [#allocation5], 1
    %30 = vsyncpa %s29, 0
    loop: start=0, step=1, limit=10
    $region2: #{base_encoder_forward.1} parent=1 // loop_pre_header
      _
    $region3: #{base_encoder_forward.1} parent=1 // loop_header
      %s32 = sphi 0, %s36
      %p33 = scmp.ge.s32.totalorder %s32, 10
      %s39 = sphi 0, %s51
      %s40 = sphi 0, %s47
      %s41 = sphi 0, %s39
      %s42 = sphi 0, %s40
      %s43 = sphi 0, %s41
      %s44 = sphi 0, %s42
      %s54 = sphi 0, %s56
      %s57 = sphi 0, %s54
      %s58 = sphi 0, %s57
      %s74 = sphi 0, %s58
      %s80 = sphi 0, %s82
      %s83 = sphi 0, %s80
      %s84 = sphi 0, %s83
      %s100 = sphi 0, %s84
      %s104 = sphi 0, %s104
      %s106 = sphi 0, %s104
      %s107 = sphi 0, %s106
      %s121 = sphi 0, %s107
      %s125 = sphi 0, %s125
      %s127 = sphi 0, %s125
      %s128 = sphi 0, %s127
      %s142 = sphi 0, %s128
      %s148 = sphi 0, %s150
      %s151 = sphi 0, %s148
      %s152 = sphi 0, %s151
      %s168 = sphi 0, %s152
      %s174 = sphi 0, %s176
      %s177 = sphi 0, %s174
      %s178 = sphi 0, %s177
      %s194 = sphi 0, %s178
      %s200 = sphi 0, %s202
      %s203 = sphi 0, %s200
      %s204 = sphi 0, %s203
      %s220 = sphi 0, %s204
      %s226 = sphi 0, %s228
      %s229 = sphi 0, %s226
      %s230 = sphi 0, %s229
      %s246 = sphi 0, %s230
      %s252 = sphi 0, %s254
      %s255 = sphi 0, %s252
      %s256 = sphi 0, %s255
      %s272 = sphi 0, %s256
      %s278 = sphi 0, %s280
      %s281 = sphi 0, %s278
      %s282 = sphi 0, %s281
      %s298 = sphi 0, %s282
      %s304 = sphi 0, %s306
      %s307 = sphi 0, %s304
      %s308 = sphi 0, %s307
      %s324 = sphi 0, %s308
      %s330 = sphi 0, %s332
      %s333 = sphi 0, %s330
      %s334 = sphi 0, %s333
      %s350 = sphi 0, %s334
      %s356 = sphi 0, %s358
      %s359 = sphi 0, %s356
      %s360 = sphi 0, %s359
      %s376 = sphi 0, %s360
      %s382 = sphi 0, %s384
      %s385 = sphi 0, %s382
      %s386 = sphi 0, %s385
      %s402 = sphi 0, %s386
      %s408 = sphi 0, %s410
      %s411 = sphi 0, %s408
      %s412 = sphi 0, %s411
      %s428 = sphi 0, %s412
      %s434 = sphi 0, %s436
      %s437 = sphi 0, %s434
      %s438 = sphi 0, %s437
      %s454 = sphi 0, %s438
      %s458 = sphi 0, %s458
      %s460 = sphi 0, %s458
      %s461 = sphi 0, %s460
      %s475 = sphi 0, %s461
      %s479 = sphi 0, %s479
      %s481 = sphi 0, %s479
      %s482 = sphi 0, %s481
      %s496 = sphi 0, %s482
      %s502 = sphi 0, %s504
      %s505 = sphi 0, %s502
      %s506 = sphi 0, %s505
      %s522 = sphi 0, %s506
      %s528 = sphi 0, %s530
      %s531 = sphi 0, %s528
      %s532 = sphi 0, %s531
      %s548 = sphi 0, %s532
    $region4: #{base_encoder_forward.1} parent=1 // loop_header_branch
      %35 = sbr.rel (%p33) target = $region8
    $region5: #{base_encoder_forward.1} parent=1 // loop_body
      %s37 = ssub.s32 %s32, 1
      %s38 = ssub.s32 %s32, 2
      %s45 = sadd.s32 1, %s40
      %p46 = scmp.ge.s32.totalorder %s45, 4
      %s47 = scalar_select %p46, 0, %s45
      %s48 = sadd.s32 1, %s39
      %s49 = scalar_select %p46, %s48, %s39
      %p50 = scmp.ge.s32.totalorder %s49, 2
      %s51 = scalar_select %p50, 0, %s49
      %s52 = ssub.s32 %s39, %s51
      %p53 = scmp.eq.s32.totalorder %s52, 0
      %s55 = sadd.s32 %s54, 1
      %s56 = scalar_select %p53, %s54, %s55
      %p59 = pneg %p53
      %p60 = scmp.eq.s32.totalorder %s32, 7
      %p61 = por %p59, %p60
      %p62 = scmp.ne.s32.totalorder %s54, %s57
      %p63 = scmp.eq.s32.totalorder %s32, 0
      %p64 = por %p62, %p63
      %p65 = scmp.ne.s32.totalorder %s54, %s57
      %p66 = scmp.eq.s32.totalorder %s37, 7
      %p67 = por %p65, %p66
      %p68 = scmp.ne.s32.totalorder %s57, %s58
      %p69 = scmp.eq.s32.totalorder %s37, 0
      %p70 = por %p68, %p69
      %p71 = scmp.ne.s32.totalorder %s57, %s58
      %p72 = scmp.eq.s32.totalorder %s38, 7
      %p73 = por %p71, %p72
      %p75 = scmp.ne.s32.totalorder %s58, %s74
      %p76 = scmp.eq.s32.totalorder %s38, 0
      %p77 = por %p75, %p76
      %s78 = ssub.s32 %s39, %s51
      %p79 = scmp.eq.s32.totalorder %s78, 0
      %s81 = sadd.s32 %s80, 1
      %s82 = scalar_select %p79, %s80, %s81
      %p85 = pneg %p79
      %p86 = scmp.eq.s32.totalorder %s32, 7
      %p87 = por %p85, %p86
      %p88 = scmp.ne.s32.totalorder %s80, %s83
      %p89 = scmp.eq.s32.totalorder %s32, 0
      %p90 = por %p88, %p89
      %p91 = scmp.ne.s32.totalorder %s80, %s83
      %p92 = scmp.eq.s32.totalorder %s37, 7
      %p93 = por %p91, %p92
      %p94 = scmp.ne.s32.totalorder %s83, %s84
      %p95 = scmp.eq.s32.totalorder %s37, 0
      %p96 = por %p94, %p95
      %p97 = scmp.ne.s32.totalorder %s83, %s84
      %p98 = scmp.eq.s32.totalorder %s38, 7
      %p99 = por %p97, %p98
      %p101 = scmp.ne.s32.totalorder %s84, %s100
      %p102 = scmp.eq.s32.totalorder %s38, 0
      %p103 = por %p101, %p102
      %s105 = sadd.s32 %s104, 1
      %p108 = scmp.eq.s32.totalorder %s32, 7
      %p109 = scmp.ne.s32.totalorder %s104, %s106
      %p110 = scmp.eq.s32.totalorder %s32, 0
      %p111 = por %p109, %p110
      %p112 = scmp.ne.s32.totalorder %s104, %s106
      %p113 = scmp.eq.s32.totalorder %s37, 7
      %p114 = por %p112, %p113
      %p115 = scmp.ne.s32.totalorder %s106, %s107
      %p116 = scmp.eq.s32.totalorder %s37, 0
      %p117 = por %p115, %p116
      %p118 = scmp.ne.s32.totalorder %s106, %s107
      %p119 = scmp.eq.s32.totalorder %s38, 7
      %p120 = por %p118, %p119
      %p122 = scmp.ne.s32.totalorder %s107, %s121
      %p123 = scmp.eq.s32.totalorder %s38, 0
      %p124 = por %p122, %p123
      %s126 = sadd.s32 %s125, 1
      %p129 = scmp.eq.s32.totalorder %s32, 7
      %p130 = scmp.ne.s32.totalorder %s125, %s127
      %p131 = scmp.eq.s32.totalorder %s32, 0
      %p132 = por %p130, %p131
      %p133 = scmp.ne.s32.totalorder %s125, %s127
      %p134 = scmp.eq.s32.totalorder %s37, 7
      %p135 = por %p133, %p134
      %p136 = scmp.ne.s32.totalorder %s127, %s128
      %p137 = scmp.eq.s32.totalorder %s37, 0
      %p138 = por %p136, %p137
      %p139 = scmp.ne.s32.totalorder %s127, %s128
      %p140 = scmp.eq.s32.totalorder %s38, 7
      %p141 = por %p139, %p140
      %p143 = scmp.ne.s32.totalorder %s128, %s142
      %p144 = scmp.eq.s32.totalorder %s38, 0
      %p145 = por %p143, %p144
      %s146 = ssub.s32 %s40, %s47
      %p147 = scmp.eq.s32.totalorder %s146, 0
      %s149 = sadd.s32 %s148, 1
      %s150 = scalar_select %p147, %s148, %s149
      %p153 = pneg %p147
      %p154 = scmp.eq.s32.totalorder %s32, 7
      %p155 = por %p153, %p154
      %p156 = scmp.ne.s32.totalorder %s148, %s151
      %p157 = scmp.eq.s32.totalorder %s32, 0
      %p158 = por %p156, %p157
      %p159 = scmp.ne.s32.totalorder %s148, %s151
      %p160 = scmp.eq.s32.totalorder %s37, 7
      %p161 = por %p159, %p160
      %p162 = scmp.ne.s32.totalorder %s151, %s152
      %p163 = scmp.eq.s32.totalorder %s37, 0
      %p164 = por %p162, %p163
      %p165 = scmp.ne.s32.totalorder %s151, %s152
      %p166 = scmp.eq.s32.totalorder %s38, 7
      %p167 = por %p165, %p166
      %p169 = scmp.ne.s32.totalorder %s152, %s168
      %p170 = scmp.eq.s32.totalorder %s38, 0
      %p171 = por %p169, %p170
      %s172 = ssub.s32 %s40, %s47
      %p173 = scmp.eq.s32.totalorder %s172, 0
      %s175 = sadd.s32 %s174, 1
      %s176 = scalar_select %p173, %s174, %s175
      %p179 = pneg %p173
      %p180 = scmp.eq.s32.totalorder %s32, 7
      %p181 = por %p179, %p180
      %p182 = scmp.ne.s32.totalorder %s174, %s177
      %p183 = scmp.eq.s32.totalorder %s32, 0
      %p184 = por %p182, %p183
      %p185 = scmp.ne.s32.totalorder %s174, %s177
      %p186 = scmp.eq.s32.totalorder %s37, 7
      %p187 = por %p185, %p186
      %p188 = scmp.ne.s32.totalorder %s177, %s178
      %p189 = scmp.eq.s32.totalorder %s37, 0
      %p190 = por %p188, %p189
      %p191 = scmp.ne.s32.totalorder %s177, %s178
      %p192 = scmp.eq.s32.totalorder %s38, 7
      %p193 = por %p191, %p192
      %p195 = scmp.ne.s32.totalorder %s178, %s194
      %p196 = scmp.eq.s32.totalorder %s38, 0
      %p197 = por %p195, %p196
      %s198 = ssub.s32 %s40, %s47
      %p199 = scmp.eq.s32.totalorder %s198, 0
      %s201 = sadd.s32 %s200, 1
      %s202 = scalar_select %p199, %s200, %s201
      %p205 = pneg %p199
      %p206 = scmp.eq.s32.totalorder %s32, 7
      %p207 = por %p205, %p206
      %p208 = scmp.ne.s32.totalorder %s200, %s203
      %p209 = scmp.eq.s32.totalorder %s32, 0
      %p210 = por %p208, %p209
      %p211 = scmp.ne.s32.totalorder %s200, %s203
      %p212 = scmp.eq.s32.totalorder %s37, 7
      %p213 = por %p211, %p212
      %p214 = scmp.ne.s32.totalorder %s203, %s204
      %p215 = scmp.eq.s32.totalorder %s37, 0
      %p216 = por %p214, %p215
      %p217 = scmp.ne.s32.totalorder %s203, %s204
      %p218 = scmp.eq.s32.totalorder %s38, 7
      %p219 = por %p217, %p218
      %p221 = scmp.ne.s32.totalorder %s204, %s220
      %p222 = scmp.eq.s32.totalorder %s38, 0
      %p223 = por %p221, %p222
      %s224 = ssub.s32 %s40, %s47
      %p225 = scmp.eq.s32.totalorder %s224, 0
      %s227 = sadd.s32 %s226, 1
      %s228 = scalar_select %p225, %s226, %s227
      %p231 = pneg %p225
      %p232 = scmp.eq.s32.totalorder %s32, 7
      %p233 = por %p231, %p232
      %p234 = scmp.ne.s32.totalorder %s226, %s229
      %p235 = scmp.eq.s32.totalorder %s32, 0
      %p236 = por %p234, %p235
      %p237 = scmp.ne.s32.totalorder %s226, %s229
      %p238 = scmp.eq.s32.totalorder %s37, 7
      %p239 = por %p237, %p238
      %p240 = scmp.ne.s32.totalorder %s229, %s230
      %p241 = scmp.eq.s32.totalorder %s37, 0
      %p242 = por %p240, %p241
      %p243 = scmp.ne.s32.totalorder %s229, %s230
      %p244 = scmp.eq.s32.totalorder %s38, 7
      %p245 = por %p243, %p244
      %p247 = scmp.ne.s32.totalorder %s230, %s246
      %p248 = scmp.eq.s32.totalorder %s38, 0
      %p249 = por %p247, %p248
      %s250 = ssub.s32 %s40, %s47
      %p251 = scmp.eq.s32.totalorder %s250, 0
      %s253 = sadd.s32 %s252, 1
      %s254 = scalar_select %p251, %s252, %s253
      %p257 = pneg %p251
      %p258 = scmp.eq.s32.totalorder %s32, 7
      %p259 = por %p257, %p258
      %p260 = scmp.ne.s32.totalorder %s252, %s255
      %p261 = scmp.eq.s32.totalorder %s32, 0
      %p262 = por %p260, %p261
      %p263 = scmp.ne.s32.totalorder %s252, %s255
      %p264 = scmp.eq.s32.totalorder %s37, 7
      %p265 = por %p263, %p264
      %p266 = scmp.ne.s32.totalorder %s255, %s256
      %p267 = scmp.eq.s32.totalorder %s37, 0
      %p268 = por %p266, %p267
      %p269 = scmp.ne.s32.totalorder %s255, %s256
      %p270 = scmp.eq.s32.totalorder %s38, 7
      %p271 = por %p269, %p270
      %p273 = scmp.ne.s32.totalorder %s256, %s272
      %p274 = scmp.eq.s32.totalorder %s38, 0
      %p275 = por %p273, %p274
      %s276 = ssub.s32 %s40, %s47
      %p277 = scmp.eq.s32.totalorder %s276, 0
      %s279 = sadd.s32 %s278, 1
      %s280 = scalar_select %p277, %s278, %s279
      %p283 = pneg %p277
      %p284 = scmp.eq.s32.totalorder %s32, 7
      %p285 = por %p283, %p284
      %p286 = scmp.ne.s32.totalorder %s278, %s281
      %p287 = scmp.eq.s32.totalorder %s32, 0
      %p288 = por %p286, %p287
      %p289 = scmp.ne.s32.totalorder %s278, %s281
      %p290 = scmp.eq.s32.totalorder %s37, 7
      %p291 = por %p289, %p290
      %p292 = scmp.ne.s32.totalorder %s281, %s282
      %p293 = scmp.eq.s32.totalorder %s37, 0
      %p294 = por %p292, %p293
      %p295 = scmp.ne.s32.totalorder %s281, %s282
      %p296 = scmp.eq.s32.totalorder %s38, 7
      %p297 = por %p295, %p296
      %p299 = scmp.ne.s32.totalorder %s282, %s298
      %p300 = scmp.eq.s32.totalorder %s38, 0
      %p301 = por %p299, %p300
      %s302 = ssub.s32 %s40, %s47
      %p303 = scmp.eq.s32.totalorder %s302, 0
      %s305 = sadd.s32 %s304, 1
      %s306 = scalar_select %p303, %s304, %s305
      %p309 = pneg %p303
      %p310 = scmp.eq.s32.totalorder %s32, 7
      %p311 = por %p309, %p310
      %p312 = scmp.ne.s32.totalorder %s304, %s307
      %p313 = scmp.eq.s32.totalorder %s32, 0
      %p314 = por %p312, %p313
      %p315 = scmp.ne.s32.totalorder %s304, %s307
      %p316 = scmp.eq.s32.totalorder %s37, 7
      %p317 = por %p315, %p316
      %p318 = scmp.ne.s32.totalorder %s307, %s308
      %p319 = scmp.eq.s32.totalorder %s37, 0
      %p320 = por %p318, %p319
      %p321 = scmp.ne.s32.totalorder %s307, %s308
      %p322 = scmp.eq.s32.totalorder %s38, 7
      %p323 = por %p321, %p322
      %p325 = scmp.ne.s32.totalorder %s308, %s324
      %p326 = scmp.eq.s32.totalorder %s38, 0
      %p327 = por %p325, %p326
      %s328 = ssub.s32 %s40, %s47
      %p329 = scmp.eq.s32.totalorder %s328, 0
      %s331 = sadd.s32 %s330, 1
      %s332 = scalar_select %p329, %s330, %s331
      %p335 = pneg %p329
      %p336 = scmp.eq.s32.totalorder %s32, 7
      %p337 = por %p335, %p336
      %p338 = scmp.ne.s32.totalorder %s330, %s333
      %p339 = scmp.eq.s32.totalorder %s32, 0
      %p340 = por %p338, %p339
      %p341 = scmp.ne.s32.totalorder %s330, %s333
      %p342 = scmp.eq.s32.totalorder %s37, 7
      %p343 = por %p341, %p342
      %p344 = scmp.ne.s32.totalorder %s333, %s334
      %p345 = scmp.eq.s32.totalorder %s37, 0
      %p346 = por %p344, %p345
      %p347 = scmp.ne.s32.totalorder %s333, %s334
      %p348 = scmp.eq.s32.totalorder %s38, 7
      %p349 = por %p347, %p348
      %p351 = scmp.ne.s32.totalorder %s334, %s350
      %p352 = scmp.eq.s32.totalorder %s38, 0
      %p353 = por %p351, %p352
      %s354 = ssub.s32 %s40, %s47
      %p355 = scmp.eq.s32.totalorder %s354, 0
      %s357 = sadd.s32 %s356, 1
      %s358 = scalar_select %p355, %s356, %s357
      %p361 = pneg %p355
      %p362 = scmp.eq.s32.totalorder %s32, 7
      %p363 = por %p361, %p362
      %p364 = scmp.ne.s32.totalorder %s356, %s359
      %p365 = scmp.eq.s32.totalorder %s32, 0
      %p366 = por %p364, %p365
      %p367 = scmp.ne.s32.totalorder %s356, %s359
      %p368 = scmp.eq.s32.totalorder %s37, 7
      %p369 = por %p367, %p368
      %p370 = scmp.ne.s32.totalorder %s359, %s360
      %p371 = scmp.eq.s32.totalorder %s37, 0
      %p372 = por %p370, %p371
      %p373 = scmp.ne.s32.totalorder %s359, %s360
      %p374 = scmp.eq.s32.totalorder %s38, 7
      %p375 = por %p373, %p374
      %p377 = scmp.ne.s32.totalorder %s360, %s376
      %p378 = scmp.eq.s32.totalorder %s38, 0
      %p379 = por %p377, %p378
      %s380 = ssub.s32 %s40, %s47
      %p381 = scmp.eq.s32.totalorder %s380, 0
      %s383 = sadd.s32 %s382, 1
      %s384 = scalar_select %p381, %s382, %s383
      %p387 = pneg %p381
      %p388 = scmp.eq.s32.totalorder %s32, 7
      %p389 = por %p387, %p388
      %p390 = scmp.ne.s32.totalorder %s382, %s385
      %p391 = scmp.eq.s32.totalorder %s32, 0
      %p392 = por %p390, %p391
      %p393 = scmp.ne.s32.totalorder %s382, %s385
      %p394 = scmp.eq.s32.totalorder %s37, 7
      %p395 = por %p393, %p394
      %p396 = scmp.ne.s32.totalorder %s385, %s386
      %p397 = scmp.eq.s32.totalorder %s37, 0
      %p398 = por %p396, %p397
      %p399 = scmp.ne.s32.totalorder %s385, %s386
      %p400 = scmp.eq.s32.totalorder %s38, 7
      %p401 = por %p399, %p400
      %p403 = scmp.ne.s32.totalorder %s386, %s402
      %p404 = scmp.eq.s32.totalorder %s38, 0
      %p405 = por %p403, %p404
      %s406 = ssub.s32 %s40, %s47
      %p407 = scmp.eq.s32.totalorder %s406, 0
      %s409 = sadd.s32 %s408, 1
      %s410 = scalar_select %p407, %s408, %s409
      %p413 = pneg %p407
      %p414 = scmp.eq.s32.totalorder %s32, 7
      %p415 = por %p413, %p414
      %p416 = scmp.ne.s32.totalorder %s408, %s411
      %p417 = scmp.eq.s32.totalorder %s32, 0
      %p418 = por %p416, %p417
      %p419 = scmp.ne.s32.totalorder %s408, %s411
      %p420 = scmp.eq.s32.totalorder %s37, 7
      %p421 = por %p419, %p420
      %p422 = scmp.ne.s32.totalorder %s411, %s412
      %p423 = scmp.eq.s32.totalorder %s37, 0
      %p424 = por %p422, %p423
      %p425 = scmp.ne.s32.totalorder %s411, %s412
      %p426 = scmp.eq.s32.totalorder %s38, 7
      %p427 = por %p425, %p426
      %p429 = scmp.ne.s32.totalorder %s412, %s428
      %p430 = scmp.eq.s32.totalorder %s38, 0
      %p431 = por %p429, %p430
      %s432 = ssub.s32 %s40, %s47
      %p433 = scmp.eq.s32.totalorder %s432, 0
      %s435 = sadd.s32 %s434, 1
      %s436 = scalar_select %p433, %s434, %s435
      %p439 = pneg %p433
      %p440 = scmp.eq.s32.totalorder %s32, 7
      %p441 = por %p439, %p440
      %p442 = scmp.ne.s32.totalorder %s434, %s437
      %p443 = scmp.eq.s32.totalorder %s32, 0
      %p444 = por %p442, %p443
      %p445 = scmp.ne.s32.totalorder %s434, %s437
      %p446 = scmp.eq.s32.totalorder %s37, 7
      %p447 = por %p445, %p446
      %p448 = scmp.ne.s32.totalorder %s437, %s438
      %p449 = scmp.eq.s32.totalorder %s37, 0
      %p450 = por %p448, %p449
      %p451 = scmp.ne.s32.totalorder %s437, %s438
      %p452 = scmp.eq.s32.totalorder %s38, 7
      %p453 = por %p451, %p452
      %p455 = scmp.ne.s32.totalorder %s438, %s454
      %p456 = scmp.eq.s32.totalorder %s38, 0
      %p457 = por %p455, %p456
      %s459 = sadd.s32 %s458, 1
      %p462 = scmp.eq.s32.totalorder %s32, 7
      %p463 = scmp.ne.s32.totalorder %s458, %s460
      %p464 = scmp.eq.s32.totalorder %s32, 0
      %p465 = por %p463, %p464
      %p466 = scmp.ne.s32.totalorder %s458, %s460
      %p467 = scmp.eq.s32.totalorder %s37, 7
      %p468 = por %p466, %p467
      %p469 = scmp.ne.s32.totalorder %s460, %s461
      %p470 = scmp.eq.s32.totalorder %s37, 0
      %p471 = por %p469, %p470
      %p472 = scmp.ne.s32.totalorder %s460, %s461
      %p473 = scmp.eq.s32.totalorder %s38, 7
      %p474 = por %p472, %p473
      %p476 = scmp.ne.s32.totalorder %s461, %s475
      %p477 = scmp.eq.s32.totalorder %s38, 0
      %p478 = por %p476, %p477
      %s480 = sadd.s32 %s479, 1
      %p483 = scmp.eq.s32.totalorder %s32, 7
      %p484 = scmp.ne.s32.totalorder %s479, %s481
      %p485 = scmp.eq.s32.totalorder %s32, 0
      %p486 = por %p484, %p485
      %p487 = scmp.ne.s32.totalorder %s479, %s481
      %p488 = scmp.eq.s32.totalorder %s37, 7
      %p489 = por %p487, %p488
      %p490 = scmp.ne.s32.totalorder %s481, %s482
      %p491 = scmp.eq.s32.totalorder %s37, 0
      %p492 = por %p490, %p491
      %p493 = scmp.ne.s32.totalorder %s481, %s482
      %p494 = scmp.eq.s32.totalorder %s38, 7
      %p495 = por %p493, %p494
      %p497 = scmp.ne.s32.totalorder %s482, %s496
      %p498 = scmp.eq.s32.totalorder %s38, 0
      %p499 = por %p497, %p498
      %s500 = ssub.s32 %s39, %s51
      %p501 = scmp.eq.s32.totalorder %s500, 0
      %s503 = sadd.s32 %s502, 1
      %s504 = scalar_select %p501, %s502, %s503
      %p507 = pneg %p501
      %p508 = scmp.eq.s32.totalorder %s32, 7
      %p509 = por %p507, %p508
      %p510 = scmp.ne.s32.totalorder %s502, %s505
      %p511 = scmp.eq.s32.totalorder %s32, 0
      %p512 = por %p510, %p511
      %p513 = scmp.ne.s32.totalorder %s502, %s505
      %p514 = scmp.eq.s32.totalorder %s37, 7
      %p515 = por %p513, %p514
      %p516 = scmp.ne.s32.totalorder %s505, %s506
      %p517 = scmp.eq.s32.totalorder %s37, 0
      %p518 = por %p516, %p517
      %p519 = scmp.ne.s32.totalorder %s505, %s506
      %p520 = scmp.eq.s32.totalorder %s38, 7
      %p521 = por %p519, %p520
      %p523 = scmp.ne.s32.totalorder %s506, %s522
      %p524 = scmp.eq.s32.totalorder %s38, 0
      %p525 = por %p523, %p524
      %s526 = ssub.s32 %s39, %s51
      %p527 = scmp.eq.s32.totalorder %s526, 0
      %s529 = sadd.s32 %s528, 1
      %s530 = scalar_select %p527, %s528, %s529
      %p533 = pneg %p527
      %p534 = scmp.eq.s32.totalorder %s32, 7
      %p535 = por %p533, %p534
      %p536 = scmp.ne.s32.totalorder %s528, %s531
      %p537 = scmp.eq.s32.totalorder %s32, 0
      %p538 = por %p536, %p537
      %p539 = scmp.ne.s32.totalorder %s528, %s531
      %p540 = scmp.eq.s32.totalorder %s37, 7
      %p541 = por %p539, %p540
      %p542 = scmp.ne.s32.totalorder %s531, %s532
      %p543 = scmp.eq.s32.totalorder %s37, 0
      %p544 = por %p542, %p543
      %p545 = scmp.ne.s32.totalorder %s531, %s532
      %p546 = scmp.eq.s32.totalorder %s38, 7
      %p547 = por %p545, %p546
      %p549 = scmp.ne.s32.totalorder %s532, %s548
      %p550 = scmp.eq.s32.totalorder %s38, 0
      %p551 = por %p549, %p550
      %p552 = scmp.le.s32.totalorder 1, %s32
      %p553 = scmp.lt.s32.totalorder %s32, 9
      %p554 = pnand %p552, %p553
      %p555 = pneg %p554
      // Predicated region
      $region9: #{base_encoder_forward.1} parent=5 // pred_check
        _
      $region10: #{base_encoder_forward.1} parent=5 // pred_check_branch
        %557 = sbr.rel (%p554) target = $region12
      $region11: #{base_encoder_forward.1} parent=5 // pred_region
        %s558 = ssub.s32 %s32, 1
        // Predicated region
        $region13: #{base_encoder_forward.1} parent=11 // pred_check
          %p559 = pneg %p117
        $region14: #{base_encoder_forward.1} parent=11 // pred_check_branch
          %561 = sbr.rel (%p559) target = $region16
        $region15: #{base_encoder_forward.1} parent=11 // pred_region
          _
        $region16: #{base_encoder_forward.1} parent=11 // pred_fallthru
          _
        // Predicated region
        $region17: #{base_encoder_forward.1} parent=11 // pred_check
          %p562 = pneg %p138
        $region18: #{base_encoder_forward.1} parent=11 // pred_check_branch
          %564 = sbr.rel (%p562) target = $region20
        $region19: #{base_encoder_forward.1} parent=11 // pred_region
          _
        $region20: #{base_encoder_forward.1} parent=11 // pred_fallthru
          _
        // Predicated region
        $region21: #{base_encoder_forward.1} parent=11 // pred_check
          %p565 = pneg %p471
        $region22: #{base_encoder_forward.1} parent=11 // pred_check_branch
          %567 = sbr.rel (%p565) target = $region24
        $region23: #{base_encoder_forward.1} parent=11 // pred_region
          _
        $region24: #{base_encoder_forward.1} parent=11 // pred_fallthru
          _
        // Predicated region
        $region25: #{base_encoder_forward.1} parent=11 // pred_check
          %p568 = pneg %p492
        $region26: #{base_encoder_forward.1} parent=11 // pred_check_branch
          %570 = sbr.rel (%p568) target = $region28
        $region27: #{base_encoder_forward.1} parent=11 // pred_region
          _
        $region28: #{base_encoder_forward.1} parent=11 // pred_fallthru
          _
      $region12: #{base_encoder_forward.1} parent=5 // pred_fallthru
        _
      %p571 = scmp.lt.s32.totalorder %s32, 8
      // Predicated region
      $region29: #{base_encoder_forward.1} parent=5 // pred_check
        %p572 = pneg %p571
      $region30: #{base_encoder_forward.1} parent=5 // pred_check_branch
        %574 = sbr.rel (%p572) target = $region32
      $region31: #{base_encoder_forward.1} parent=5 // pred_region
        // Predicated region
        $region33: #{base_encoder_forward.1} parent=31 // pred_check
          %p575 = pneg %p64
        $region34: #{base_encoder_forward.1} parent=31 // pred_check_branch
          %577 = sbr.rel (%p575) target = $region36
        $region35: #{base_encoder_forward.1} parent=31 // pred_region
          %p578 = scmp.lt.s32.totalorder %s39, 1
          %s579 = scalar_select %p578, %s39, 1
          %s580 = smul.addr %s579, 8
          %s581 = scalar_lea.vmem %s0, %s580
        $region36: #{base_encoder_forward.1} parent=31 // pred_fallthru
          _
        // Predicated region
        $region37: #{base_encoder_forward.1} parent=31 // pred_check
          %p582 = pneg %p90
        $region38: #{base_encoder_forward.1} parent=31 // pred_check_branch
          %584 = sbr.rel (%p582) target = $region40
        $region39: #{base_encoder_forward.1} parent=31 // pred_region
          %p585 = scmp.lt.s32.totalorder %s39, 1
          %s586 = scalar_select %p585, %s39, 1
          %s587 = scalar_lea.vmem %s1, %s586
        $region40: #{base_encoder_forward.1} parent=31 // pred_fallthru
          _
        // Predicated region
        $region41: #{base_encoder_forward.1} parent=31 // pred_check
          %p588 = pneg %p158
        $region42: #{base_encoder_forward.1} parent=31 // pred_check_branch
          %590 = sbr.rel (%p588) target = $region44
        $region43: #{base_encoder_forward.1} parent=31 // pred_region
          %p591 = scmp.lt.s32.totalorder %s40, 3
          %s592 = scalar_select %p591, %s40, 3
          %s593 = smul.addr %s592, 4
          %s594 = smul.addr %s593, 4
          %s595 = scalar_lea.vmem %s4, %s594
        $region44: #{base_encoder_forward.1} parent=31 // pred_fallthru
          _
        // Predicated region
        $region45: #{base_encoder_forward.1} parent=31 // pred_check
          %p596 = pneg %p184
        $region46: #{base_encoder_forward.1} parent=31 // pred_check_branch
          %598 = sbr.rel (%p596) target = $region48
        $region47: #{base_encoder_forward.1} parent=31 // pred_region
          %p599 = scmp.lt.s32.totalorder %s40, 3
          %s600 = scalar_select %p599, %s40, 3
          %s601 = scalar_lea.vmem %s5, %s600
        $region48: #{base_encoder_forward.1} parent=31 // pred_fallthru
          _
        // Predicated region
        $region49: #{base_encoder_forward.1} parent=31 // pred_check
          %p602 = pneg %p210
        $region50: #{base_encoder_forward.1} parent=31 // pred_check_branch
          %604 = sbr.rel (%p602) target = $region52
        $region51: #{base_encoder_forward.1} parent=31 // pred_region
          %p605 = scmp.lt.s32.totalorder %s40, 3
          %s606 = scalar_select %p605, %s40, 3
          %s607 = smul.addr %s606, 4
          %s608 = smul.addr %s607, 4
          %s609 = scalar_lea.vmem %s6, %s608
        $region52: #{base_encoder_forward.1} parent=31 // pred_fallthru
          _
        // Predicated region
        $region53: #{base_encoder_forward.1} parent=31 // pred_check
          %p610 = pneg %p236
        $region54: #{base_encoder_forward.1} parent=31 // pred_check_branch
          %612 = sbr.rel (%p610) target = $region56
        $region55: #{base_encoder_forward.1} parent=31 // pred_region
          %p613 = scmp.lt.s32.totalorder %s40, 3
          %s614 = scalar_select %p613, %s40, 3
          %s615 = scalar_lea.vmem %s7, %s614
        $region56: #{base_encoder_forward.1} parent=31 // pred_fallthru
          _
        // Predicated region
        $region57: #{base_encoder_forward.1} parent=31 // pred_check
          %p616 = pneg %p262
        $region58: #{base_encoder_forward.1} parent=31 // pred_check_branch
          %618 = sbr.rel (%p616) target = $region60
        $region59: #{base_encoder_forward.1} parent=31 // pred_region
          %p619 = scmp.lt.s32.totalorder %s40, 3
          %s620 = scalar_select %p619, %s40, 3
          %s621 = scalar_lea.vmem %s8, %s620
        $region60: #{base_encoder_forward.1} parent=31 // pred_fallthru
          _
        // Predicated region
        $region61: #{base_encoder_forward.1} parent=31 // pred_check
          %p622 = pneg %p288
        $region62: #{base_encoder_forward.1} parent=31 // pred_check_branch
          %624 = sbr.rel (%p622) target = $region64
        $region63: #{base_encoder_forward.1} parent=31 // pred_region
          %p625 = scmp.lt.s32.totalorder %s40, 3
          %s626 = scalar_select %p625, %s40, 3
          %s627 = scalar_lea.vmem %s9, %s626
        $region64: #{base_encoder_forward.1} parent=31 // pred_fallthru
          _
        // Predicated region
        $region65: #{base_encoder_forward.1} parent=31 // pred_check
          %p628 = pneg %p314
        $region66: #{base_encoder_forward.1} parent=31 // pred_check_branch
          %630 = sbr.rel (%p628) target = $region68
        $region67: #{base_encoder_forward.1} parent=31 // pred_region
          %p631 = scmp.lt.s32.totalorder %s40, 3
          %s632 = scalar_select %p631, %s40, 3
          %s633 = smul.addr %s632, 4
          %s634 = smul.addr %s633, 4
          %s635 = scalar_lea.vmem %s10, %s634
        $region68: #{base_encoder_forward.1} parent=31 // pred_fallthru
          _
        // Predicated region
        $region69: #{base_encoder_forward.1} parent=31 // pred_check
          %p636 = pneg %p340
        $region70: #{base_encoder_forward.1} parent=31 // pred_check_branch
          %638 = sbr.rel (%p636) target = $region72
        $region71: #{base_encoder_forward.1} parent=31 // pred_region
          %p639 = scmp.lt.s32.totalorder %s40, 3
          %s640 = scalar_select %p639, %s40, 3
          %s641 = scalar_lea.vmem %s11, %s640
        $region72: #{base_encoder_forward.1} parent=31 // pred_fallthru
          _
        // Predicated region
        $region73: #{base_encoder_forward.1} parent=31 // pred_check
          %p642 = pneg %p366
        $region74: #{base_encoder_forward.1} parent=31 // pred_check_branch
          %644 = sbr.rel (%p642) target = $region76
        $region75: #{base_encoder_forward.1} parent=31 // pred_region
          %p645 = scmp.lt.s32.totalorder %s40, 3
          %s646 = scalar_select %p645, %s40, 3
          %s647 = smul.addr %s646, 8
          %s648 = smul.addr %s647, 4
          %s649 = scalar_lea.vmem %s12, %s648
        $region76: #{base_encoder_forward.1} parent=31 // pred_fallthru
          _
        // Predicated region
        $region77: #{base_encoder_forward.1} parent=31 // pred_check
          %p650 = pneg %p392
        $region78: #{base_encoder_forward.1} parent=31 // pred_check_branch
          %652 = sbr.rel (%p650) target = $region80
        $region79: #{base_encoder_forward.1} parent=31 // pred_region
          %p653 = scmp.lt.s32.totalorder %s40, 3
          %s654 = scalar_select %p653, %s40, 3
          %s655 = scalar_lea.vmem %s13, %s654
        $region80: #{base_encoder_forward.1} parent=31 // pred_fallthru
          _
        // Predicated region
        $region81: #{base_encoder_forward.1} parent=31 // pred_check
          %p656 = pneg %p418
        $region82: #{base_encoder_forward.1} parent=31 // pred_check_branch
          %658 = sbr.rel (%p656) target = $region84
        $region83: #{base_encoder_forward.1} parent=31 // pred_region
          %p659 = scmp.lt.s32.totalorder %s40, 3
          %s660 = scalar_select %p659, %s40, 3
          %s661 = scalar_lea.vmem %s14, %s660
        $region84: #{base_encoder_forward.1} parent=31 // pred_fallthru
          _
        // Predicated region
        $region85: #{base_encoder_forward.1} parent=31 // pred_check
          %p662 = pneg %p444
        $region86: #{base_encoder_forward.1} parent=31 // pred_check_branch
          %664 = sbr.rel (%p662) target = $region88
        $region87: #{base_encoder_forward.1} parent=31 // pred_region
          %p665 = scmp.lt.s32.totalorder %s40, 3
          %s666 = scalar_select %p665, %s40, 3
          %s667 = scalar_lea.vmem %s15, %s666
        $region88: #{base_encoder_forward.1} parent=31 // pred_fallthru
          _
      $region32: #{base_encoder_forward.1} parent=5 // pred_fallthru
        _
      %p668 = scmp.le.s32.totalorder 1, %s32
      %p669 = scmp.lt.s32.totalorder %s32, 9
      %p670 = pnand %p668, %p669
      %p671 = pneg %p670
      // Predicated region
      $region89: #{base_encoder_forward.1} parent=5 // pred_check
        _
      $region90: #{base_encoder_forward.1} parent=5 // pred_check_branch
        %673 = sbr.rel (%p670) target = $region92
      $region91: #{base_encoder_forward.1} parent=5 // pred_region
        %s674 = ssub.s32 %s32, 1
        %p675 = scmp.lt.s32.totalorder %s41, 1
        %s676 = scalar_select %p675, %s41, 1
        %s677 = smul.addr %s676, 8
        %s678 = scalar_lea.vmem %s0, %s677
        %p679 = pneg %p70
        %p680 = pneg %p67
        %p681 = scmp.lt.s32.totalorder %s41, 1
        %s682 = scalar_select %p681, %s41, 1
        %s683 = scalar_lea.vmem %s1, %s682
        %p684 = pneg %p96
        %p685 = pneg %p93
        %p686 = pneg %p117
        %p687 = pneg %p114
        %p688 = pneg %p138
        %p689 = pneg %p135
        %p690 = scmp.lt.s32.totalorder %s42, 3
        %s691 = scalar_select %p690, %s42, 3
        %s692 = smul.addr %s691, 4
        %s693 = smul.addr %s692, 4
        %s694 = scalar_lea.vmem %s4, %s693
        %p695 = pneg %p164
        %p696 = pneg %p161
        %p697 = scmp.lt.s32.totalorder %s42, 3
        %s698 = scalar_select %p697, %s42, 3
        %s699 = scalar_lea.vmem %s5, %s698
        %p700 = pneg %p190
        %p701 = pneg %p187
        %p702 = scmp.lt.s32.totalorder %s42, 3
        %s703 = scalar_select %p702, %s42, 3
        %s704 = smul.addr %s703, 4
        %s705 = smul.addr %s704, 4
        %s706 = scalar_lea.vmem %s6, %s705
        %p707 = pneg %p216
        %p708 = pneg %p213
        %p709 = scmp.lt.s32.totalorder %s42, 3
        %s710 = scalar_select %p709, %s42, 3
        %s711 = scalar_lea.vmem %s7, %s710
        %p712 = pneg %p242
        %p713 = pneg %p239
        %p714 = scmp.lt.s32.totalorder %s42, 3
        %s715 = scalar_select %p714, %s42, 3
        %s716 = scalar_lea.vmem %s8, %s715
        %p717 = pneg %p268
        %p718 = pneg %p265
        %p719 = scmp.lt.s32.totalorder %s42, 3
        %s720 = scalar_select %p719, %s42, 3
        %s721 = scalar_lea.vmem %s9, %s720
        %p722 = pneg %p294
        %p723 = pneg %p291
        %p724 = scmp.lt.s32.totalorder %s42, 3
        %s725 = scalar_select %p724, %s42, 3
        %s726 = smul.addr %s725, 4
        %s727 = smul.addr %s726, 4
        %s728 = scalar_lea.vmem %s10, %s727
        %p729 = pneg %p320
        %p730 = pneg %p317
        %p731 = scmp.lt.s32.totalorder %s42, 3
        %s732 = scalar_select %p731, %s42, 3
        %s733 = scalar_lea.vmem %s11, %s732
        %p734 = pneg %p346
        %p735 = pneg %p343
        %p736 = scmp.lt.s32.totalorder %s42, 3
        %s737 = scalar_select %p736, %s42, 3
        %s738 = smul.addr %s737, 8
        %s739 = smul.addr %s738, 4
        %s740 = scalar_lea.vmem %s12, %s739
        %p741 = pneg %p372
        %p742 = pneg %p369
        %p743 = scmp.lt.s32.totalorder %s42, 3
        %s744 = scalar_select %p743, %s42, 3
        %s745 = scalar_lea.vmem %s13, %s744
        %p746 = pneg %p398
        %p747 = pneg %p395
        %p748 = scmp.lt.s32.totalorder %s42, 3
        %s749 = scalar_select %p748, %s42, 3
        %s750 = scalar_lea.vmem %s14, %s749
        %p751 = pneg %p424
        %p752 = pneg %p421
        %p753 = scmp.lt.s32.totalorder %s42, 3
        %s754 = scalar_select %p753, %s42, 3
        %s755 = scalar_lea.vmem %s15, %s754
        %p756 = pneg %p450
        %p757 = pneg %p447
        %p758 = pneg %p471
        %p759 = pneg %p468
        %p760 = pneg %p492
        %p761 = pneg %p489
        %p762 = pneg %p518
        %p763 = pneg %p515
        %s764 = sand.u32 %s505, 1
        %s765 = scalar_lea.sflag [#allocation3], %s764
        %s766 = sand.u32 %s505, 1
        %s767 = smul.addr %s766, 8
        %s768 = scalar_lea.vmem [#allocation2], %s767
        %p769 = pneg %p544
        %p770 = pneg %p541
        %s771 = sand.u32 %s531, 1
        %s772 = scalar_lea.sflag [#allocation5], %s771
        %s773 = sand.u32 %s531, 1
        %s774 = scalar_lea.vmem [#allocation4], %s773
        %p775 = scmp.lt.s32.totalorder %s41, 1
        %s776 = scalar_select %p775, %s41, 1
        %s777 = smul.addr %s776, 8
        %s778 = scalar_lea.vmem %s0, %s777
        %p779 = scmp.lt.s32.totalorder %s41, 1
        %s780 = scalar_select %p779, %s41, 1
        %s781 = scalar_lea.vmem %s1, %s780
        %p782 = scmp.lt.s32.totalorder %s42, 3
        %s783 = scalar_select %p782, %s42, 3
        %s784 = smul.addr %s783, 4
        %s785 = smul.addr %s784, 4
        %s786 = scalar_lea.vmem %s4, %s785
        %p787 = scmp.lt.s32.totalorder %s42, 3
        %s788 = scalar_select %p787, %s42, 3
        %s789 = scalar_lea.vmem %s5, %s788
        %p790 = scmp.lt.s32.totalorder %s42, 3
        %s791 = scalar_select %p790, %s42, 3
        %s792 = smul.addr %s791, 4
        %s793 = smul.addr %s792, 4
        %s794 = scalar_lea.vmem %s6, %s793
        %p795 = scmp.lt.s32.totalorder %s42, 3
        %s796 = scalar_select %p795, %s42, 3
        %s797 = scalar_lea.vmem %s7, %s796
        %p798 = scmp.lt.s32.totalorder %s42, 3
        %s799 = scalar_select %p798, %s42, 3
        %s800 = scalar_lea.vmem %s8, %s799
        %p801 = scmp.lt.s32.totalorder %s42, 3
        %s802 = scalar_select %p801, %s42, 3
        %s803 = scalar_lea.vmem %s9, %s802
        %p804 = scmp.lt.s32.totalorder %s42, 3
        %s805 = scalar_select %p804, %s42, 3
        %s806 = smul.addr %s805, 4
        %s807 = smul.addr %s806, 4
        %s808 = scalar_lea.vmem %s10, %s807
        %p809 = scmp.lt.s32.totalorder %s42, 3
        %s810 = scalar_select %p809, %s42, 3
        %s811 = scalar_lea.vmem %s11, %s810
        %p812 = scmp.lt.s32.totalorder %s42, 3
        %s813 = scalar_select %p812, %s42, 3
        %s814 = smul.addr %s813, 8
        %s815 = smul.addr %s814, 4
        %s816 = scalar_lea.vmem %s12, %s815
        %p817 = scmp.lt.s32.totalorder %s42, 3
        %s818 = scalar_select %p817, %s42, 3
        %s819 = scalar_lea.vmem %s13, %s818
        %p820 = scmp.lt.s32.totalorder %s42, 3
        %s821 = scalar_select %p820, %s42, 3
        %s822 = scalar_lea.vmem %s14, %s821
        %p823 = scmp.lt.s32.totalorder %s42, 3
        %s824 = scalar_select %p823, %s42, 3
        %s825 = scalar_lea.vmem %s15, %s824
        %p827 = scmp.eq.s32.totalorder %s42, 0
        // Predicated region
        $region93: #{base_encoder_forward.1} parent=91 // pred_check
          %p828 = pneg %p827
        $region94: #{base_encoder_forward.1} parent=91 // pred_check_branch
          %830 = sbr.rel (%p828) target = $region96
        $region95: #{base_encoder_forward.1} parent=91 // pred_region
          %v831 = vld [vmem:[%s778] sm:$0xff]
          %v832 = vld [vmem:[%s2] sm:$0x1]
          %v833 = vld [vmem:[%s3] sm:$0x1]
          %vm834 = vcmask 261120
          %v835 = vsel %vm834, %v831, 0.0
          %836 = vadd.xlane.f32.xlu0 %v835
          %v837 = vpop.xlane.xlu0 %836
          %v838 = vrcp.pop 32.0
          %v839 = vmul.f32 %v837, %v838
          %v840 = vsub.f32 %v831, %v839
          %v841 = vmul.f32 %v840, %v840
          %v842 = vsel %vm834, %v841, 0.0
          %843 = vadd.xlane.f32.xlu0 %v842
          %v844 = vpop.xlane.xlu0 %843
          %v845 = vmul.f32 %v844, %v838
          %v846 = vadd.f32 %v845, 1e-12
          %v847 = vrsqrt.pop %v846
          %v848 = vmul.f32 %v840, %v847
          %v850 = vlaneseq
          %v851 = vshrl.u32 %v850, 7
          %v852 = vsub.s32 0, %v851
          %v853 = vrot.slane %v832, %v852
          %v855 = vmul.f32 %v848, %v853
          %v857 = vlaneseq
          %v858 = vshrl.u32 %v857, 7
          %v859 = vsub.s32 0, %v858
          %v860 = vrot.slane %v833, %v859
          %v862 = vadd.f32 %v855, %v860
          %863 = vst.msk [vmem:[%s768] sm:$0xff] %vm834, %v862
        $region96: #{base_encoder_forward.1} parent=91 // pred_fallthru
          _
        %v864 = vld [vmem:[%s768] sm:$0xff]
        %v865 = vld [vmem:[%s781] sm:$0x1]
        %v866 = vpack.c.bf16 %v864, %v864
        %v867 = vld [vmem:[%s786] sm:$0xf]
        %v868 = vld [vmem:[%s786 + $0x4] sm:$0xf]
        %v869 = vld [vmem:[%s786 + $0x8] sm:$0xf]
        %v870 = vld [vmem:[%s786 + $0xc] sm:$0xf]
        %v871 = vld [vmem:[%s789] sm:$0x1]
        %v873 = vlaneseq
        %v874 = vshrl.u32 %v873, 7
        %v875 = vsub.s32 0, %v874
        %v876 = vrot.slane %v871, %v875
        %v882 = vunpack.c.l.b16 %v867
        %v883 = vunpack.c.l.b16 %v868
        %v884 = vunpack.c.l.b16 %v869
        %v885 = vunpack.c.l.b16 %v870
        %v886 = vpack.c.b16 %v883, %v882
        %v887 = vpack.c.b16 %v885, %v884
        %vm890 = vcmask 261120
        %v892 = vsel %vm890, %v866, 0
        %894 = vmatprep.subr.bf16.mxu0 0
        %895 = vmatpush1.bf16.msra.mxu0 %v886
        %896 = vmatprep.subr.bf16.mxu0 0
        %897 = vmatpush1.bf16.msra.mxu0 %v887
        %898 = vmatprep.subr.bf16.mxu0 0
        %899 = vmatpush1.bf16.msra.mxu0 0
        %900 = vmatprep.subr.bf16.mxu0 0
        %901 = vmatpush1.bf16.msra.mxu0 0
        %902 = vmatprep.subr.bf16.mxu0 0
        %903 = vmatpush1.bf16.msra.mxu0 0
        %904 = vmatprep.subr.bf16.mxu0 0
        %905 = vmatpush1.bf16.msra.mxu0 0
        %906 = vmatprep.subr.bf16.mxu0 0
        %907 = vmatpush1.bf16.msra.mxu0 0
        %908 = vmatprep.subr.bf16.mxu0 0
        %909 = vmatpush1.bf16.msra.mxu0 0
        %910 = vmatprep.subr.bf16.mxu0 0
        %911 = vmatpush1.bf16.msra.mxu0 0
        %912 = vmatprep.subr.bf16.mxu0 0
        %913 = vmatpush1.bf16.msra.mxu0 0
        %914 = vmatprep.subr.bf16.mxu0 0
        %915 = vmatpush1.bf16.msra.mxu0 0
        %916 = vmatprep.subr.bf16.mxu0 0
        %917 = vmatpush1.bf16.msra.mxu0 0
        %918 = vmatprep.subr.bf16.mxu0 0
        %919 = vmatpush1.bf16.msra.mxu0 0
        %920 = vmatprep.subr.bf16.mxu0 0
        %921 = vmatpush1.bf16.msra.mxu0 0
        %922 = vmatprep.subr.bf16.mxu0 0
        %923 = vmatpush1.bf16.msra.mxu0 0
        %924 = vmatprep.subr.bf16.mxu0 0
        %925 = vmatpush1.bf16.msra.mxu0 0
        %926 = vmatprep.mubr.bf16.mxu0 0
        %927 = vmatmul.mubr.bf16.gmra.mrb[0].mxu0 %v892
        %v928 = vpop.f32.mrb[0].mxu0
        %v929 = vadd.f32 %v876, %v928
        %v930 = vpop.f32.mrb[0].mxu0
        %v931 = vpop.f32.mrb[0].mxu0
        %v932 = vpop.f32.mrb[0].mxu0
        %933 = vdwg.mxu0
        %v934 = vmul.f32 %v929, 0.25
        %v935 = vpack.c.bf16 %v934, %v934
        %v936 = vpack.c.bf16 %v929, %v929
        %938 = vrot.lane.b32.xlu0 %v935, 112
        %v939 = vpop.permute.xlu0 %938
        %941 = vrot.lane.b32.xlu0 %v936, 112
        %v942 = vpop.permute.xlu0 %941
        %v944 = vlaneseq
        %v945 = vshrl.u32 %v944, 7
        %v946 = vsub.s32 0, %v945
        %v947 = vrot.slane %v865, %v946
        %949 = vrot.lane.b32.xlu0 %v936, 96
        %v950 = vpop.permute.xlu0 %949
        %vm951 = vcmask 130048
        %v953 = vsel %vm951, %v935, 0
        %v956 = vsel %vm951, %v950, 0
        %958 = vmatprep.subr.bf16.mxu0 0
        %959 = vmatpush1.bf16.xpose.msra.mxu0 %v956
        %960 = vmatprep.subr.bf16.mxu0 0
        %961 = vmatpush1.bf16.xpose.msra.mxu0 0
        %962 = vmatprep.subr.bf16.mxu0 0
        %963 = vmatpush1.bf16.xpose.msra.mxu0 0
        %964 = vmatprep.subr.bf16.mxu0 0
        %965 = vmatpush1.bf16.xpose.msra.mxu0 0
        %966 = vmatprep.subr.bf16.mxu0 0
        %967 = vmatpush1.bf16.xpose.msra.mxu0 0
        %968 = vmatprep.subr.bf16.mxu0 0
        %969 = vmatpush1.bf16.xpose.msra.mxu0 0
        %970 = vmatprep.subr.bf16.mxu0 0
        %971 = vmatpush1.bf16.xpose.msra.mxu0 0
        %972 = vmatprep.subr.bf16.mxu0 0
        %973 = vmatpush1.bf16.xpose.msra.mxu0 0
        %974 = vmatprep.subr.bf16.mxu0 0
        %975 = vmatpush1.bf16.xpose.msra.mxu0 0
        %976 = vmatprep.subr.bf16.mxu0 0
        %977 = vmatpush1.bf16.xpose.msra.mxu0 0
        %978 = vmatprep.subr.bf16.mxu0 0
        %979 = vmatpush1.bf16.xpose.msra.mxu0 0
        %980 = vmatprep.subr.bf16.mxu0 0
        %981 = vmatpush1.bf16.xpose.msra.mxu0 0
        %982 = vmatprep.subr.bf16.mxu0 0
        %983 = vmatpush1.bf16.xpose.msra.mxu0 0
        %984 = vmatprep.subr.bf16.mxu0 0
        %985 = vmatpush1.bf16.xpose.msra.mxu0 0
        %986 = vmatprep.subr.bf16.mxu0 0
        %987 = vmatpush1.bf16.xpose.msra.mxu0 0
        %988 = vmatprep.subr.bf16.mxu0 0
        %989 = vmatpush1.bf16.xpose.msra.mxu0 0
        %990 = vmatprep.mubr.bf16.mxu0 0
        %991 = vmatmul.mubr.bf16.gmra.mrb[0].mxu0 %v953
        %v992 = vpop.f32.mrb[0].mxu0
        %v993 = vadd.f32 %v947, %v992
        %v994 = vpop.f32.mrb[0].mxu0
        %v995 = vpop.f32.mrb[0].mxu0
        %v996 = vpop.f32.mrb[0].mxu0
        %997 = vdwg.mxu0
        %998 = vrot.lane.b32.xlu0 %v942, 96
        %v999 = vpop.permute.xlu0 %998
        %v1001 = vsel %vm951, %v939, 0
        %v1004 = vsel %vm951, %v999, 0
        %1006 = vmatprep.subr.bf16.mxu0 0
        %1007 = vmatpush1.bf16.xpose.msra.mxu0 %v1004
        %1008 = vmatprep.subr.bf16.mxu0 0
        %1009 = vmatpush1.bf16.xpose.msra.mxu0 0
        %1010 = vmatprep.subr.bf16.mxu0 0
        %1011 = vmatpush1.bf16.xpose.msra.mxu0 0
        %1012 = vmatprep.subr.bf16.mxu0 0
        %1013 = vmatpush1.bf16.xpose.msra.mxu0 0
        %1014 = vmatprep.subr.bf16.mxu0 0
        %1015 = vmatpush1.bf16.xpose.msra.mxu0 0
        %1016 = vmatprep.subr.bf16.mxu0 0
        %1017 = vmatpush1.bf16.xpose.msra.mxu0 0
        %1018 = vmatprep.subr.bf16.mxu0 0
        %1019 = vmatpush1.bf16.xpose.msra.mxu0 0
        %1020 = vmatprep.subr.bf16.mxu0 0
        %1021 = vmatpush1.bf16.xpose.msra.mxu0 0
        %1022 = vmatprep.subr.bf16.mxu0 0
        %1023 = vmatpush1.bf16.xpose.msra.mxu0 0
        %1024 = vmatprep.subr.bf16.mxu0 0
        %1025 = vmatpush1.bf16.xpose.msra.mxu0 0
        %1026 = vmatprep.subr.bf16.mxu0 0
        %1027 = vmatpush1.bf16.xpose.msra.mxu0 0
        %1028 = vmatprep.subr.bf16.mxu0 0
        %1029 = vmatpush1.bf16.xpose.msra.mxu0 0
        %1030 = vmatprep.subr.bf16.mxu0 0
        %1031 = vmatpush1.bf16.xpose.msra.mxu0 0
        %1032 = vmatprep.subr.bf16.mxu0 0
        %1033 = vmatpush1.bf16.xpose.msra.mxu0 0
        %1034 = vmatprep.subr.bf16.mxu0 0
        %1035 = vmatpush1.bf16.xpose.msra.mxu0 0
        %1036 = vmatprep.subr.bf16.mxu0 0
        %1037 = vmatpush1.bf16.xpose.msra.mxu0 0
        %1038 = vmatprep.mubr.bf16.mxu0 0
        %1039 = vmatmul.mubr.bf16.gmra.mrb[0].mxu0 %v1001
        %v1040 = vpop.f32.mrb[0].mxu0
        %v1041 = vadd.f32 %v947, %v1040
        %v1042 = vpop.f32.mrb[0].mxu0
        %v1043 = vpop.f32.mrb[0].mxu0
        %v1044 = vpop.f32.mrb[0].mxu0
        %1045 = vdwg.mxu0
        %vm1046 = vcmask 64512
        %v1047 = vsel %vm1046, %v993, -inf
        %1048 = vmax.xlane.f32.xlu0 %v1047
        %v1049 = vpop.xlane.xlu0 %1048
        %v1050 = vsel %vm1046, %v1041, -inf
        %1051 = vmax.xlane.f32.xlu0 %v1050
        %v1052 = vpop.xlane.xlu0 %1051
        %v1053 = vsub.f32 %v993, %v1049
        %v1054 = vsub.f32 %v1041, %v1052
        %v1055 = vmul.f32 %v1053, 1.442695
        %v1056 = vpow.pop %v1055
        %v1057 = vmul.f32 %v1054, 1.442695
        %v1058 = vpow.pop %v1057
        %v1059 = vsel %vm1046, %v1056, 0.0
        %1060 = vadd.xlane.f32.xlu0 %v1059
        %v1061 = vpop.xlane.xlu0 %1060
        %v1062 = vsel %vm1046, %v1058, 0.0
        %1063 = vadd.xlane.f32.xlu0 %v1062
        %v1064 = vpop.xlane.xlu0 %1063
        %v1065 = vrcp.pop %v1061
        %v1066 = vrcp.pop %v1064
        %v1067 = vmul.f32 %v1056, %v1065
        %v1068 = vmul.f32 %v1058, %v1066
        %v1069 = vpack.c.bf16 %v1067, %v1067
        %v1070 = vpack.c.bf16 %v1068, %v1068
        %1071 = vrot.lane.b32.xlu0 %v936, 64
        %v1072 = vpop.permute.xlu0 %1071
        %v1074 = vsel %vm1046, %v1069, 0
        %vm1076 = vcmask 1043456
        %v1078 = vsel %vm1076, %v1072, 0
        %1080 = vmatprep.subr.bf16.mxu0 0
        %1081 = vmatpush1.bf16.msra.mxu0 %v1078
        %1082 = vmatprep.subr.bf16.mxu0 0
        %1083 = vmatpush1.bf16.msra.mxu0 0
        %1084 = vmatprep.subr.bf16.mxu0 0
        %1085 = vmatpush1.bf16.msra.mxu0 0
        %1086 = vmatprep.subr.bf16.mxu0 0
        %1087 = vmatpush1.bf16.msra.mxu0 0
        %1088 = vmatprep.subr.bf16.mxu0 0
        %1089 = vmatpush1.bf16.msra.mxu0 0
        %1090 = vmatprep.subr.bf16.mxu0 0
        %1091 = vmatpush1.bf16.msra.mxu0 0
        %1092 = vmatprep.subr.bf16.mxu0 0
        %1093 = vmatpush1.bf16.msra.mxu0 0
        %1094 = vmatprep.subr.bf16.mxu0 0
        %1095 = vmatpush1.bf16.msra.mxu0 0
        %1096 = vmatprep.subr.bf16.mxu0 0
        %1097 = vmatpush1.bf16.msra.mxu0 0
        %1098 = vmatprep.subr.bf16.mxu0 0
        %1099 = vmatpush1.bf16.msra.mxu0 0
        %1100 = vmatprep.subr.bf16.mxu0 0
        %1101 = vmatpush1.bf16.msra.mxu0 0
        %1102 = vmatprep.subr.bf16.mxu0 0
        %1103 = vmatpush1.bf16.msra.mxu0 0
        %1104 = vmatprep.subr.bf16.mxu0 0
        %1105 = vmatpush1.bf16.msra.mxu0 0
        %1106 = vmatprep.subr.bf16.mxu0 0
        %1107 = vmatpush1.bf16.msra.mxu0 0
        %1108 = vmatprep.subr.bf16.mxu0 0
        %1109 = vmatpush1.bf16.msra.mxu0 0
        %1110 = vmatprep.subr.bf16.mxu0 0
        %1111 = vmatpush1.bf16.msra.mxu0 0
        %1112 = vmatprep.mubr.bf16.mxu0 0
        %1113 = vmatmul.mubr.bf16.gmra.mrb[0].mxu0 %v1074
        %v1114 = vpop.f32.mrb[0].mxu0
        %v1115 = vadd.f32 0.0, %v1114
        %v1116 = vpop.f32.mrb[0].mxu0
        %v1117 = vpop.f32.mrb[0].mxu0
        %v1118 = vpop.f32.mrb[0].mxu0
        %1119 = vdwg.mxu0
        %1120 = vrot.lane.b32.xlu0 %v942, 64
        %v1121 = vpop.permute.xlu0 %1120
        %v1123 = vsel %vm1046, %v1070, 0
        %v1126 = vsel %vm1076, %v1121, 0
        %1128 = vmatprep.subr.bf16.mxu0 0
        %1129 = vmatpush1.bf16.msra.mxu0 %v1126
        %1130 = vmatprep.subr.bf16.mxu0 0
        %1131 = vmatpush1.bf16.msra.mxu0 0
        %1132 = vmatprep.subr.bf16.mxu0 0
        %1133 = vmatpush1.bf16.msra.mxu0 0
        %1134 = vmatprep.subr.bf16.mxu0 0
        %1135 = vmatpush1.bf16.msra.mxu0 0
        %1136 = vmatprep.subr.bf16.mxu0 0
        %1137 = vmatpush1.bf16.msra.mxu0 0
        %1138 = vmatprep.subr.bf16.mxu0 0
        %1139 = vmatpush1.bf16.msra.mxu0 0
        %1140 = vmatprep.subr.bf16.mxu0 0
        %1141 = vmatpush1.bf16.msra.mxu0 0
        %1142 = vmatprep.subr.bf16.mxu0 0
        %1143 = vmatpush1.bf16.msra.mxu0 0
        %1144 = vmatprep.subr.bf16.mxu0 0
        %1145 = vmatpush1.bf16.msra.mxu0 0
        %1146 = vmatprep.subr.bf16.mxu0 0
        %1147 = vmatpush1.bf16.msra.mxu0 0
        %1148 = vmatprep.subr.bf16.mxu0 0
        %1149 = vmatpush1.bf16.msra.mxu0 0
        %1150 = vmatprep.subr.bf16.mxu0 0
        %1151 = vmatpush1.bf16.msra.mxu0 0
        %1152 = vmatprep.subr.bf16.mxu0 0
        %1153 = vmatpush1.bf16.msra.mxu0 0
        %1154 = vmatprep.subr.bf16.mxu0 0
        %1155 = vmatpush1.bf16.msra.mxu0 0
        %1156 = vmatprep.subr.bf16.mxu0 0
        %1157 = vmatpush1.bf16.msra.mxu0 0
        %1158 = vmatprep.subr.bf16.mxu0 0
        %1159 = vmatpush1.bf16.msra.mxu0 0
        %1160 = vmatprep.mubr.bf16.mxu0 0
        %1161 = vmatmul.mubr.bf16.gmra.mrb[0].mxu0 %v1123
        %v1162 = vpop.f32.mrb[0].mxu0
        %v1163 = vadd.f32 0.0, %v1162
        %v1164 = vpop.f32.mrb[0].mxu0
        %v1165 = vpop.f32.mrb[0].mxu0
        %v1166 = vpop.f32.mrb[0].mxu0
        %1167 = vdwg.mxu0
        %1169 = vrot.lane.b32.xlu0 %v1163, 16
        %v1170 = vpop.permute.xlu0 %1169
        %v1172 = vsel %vm951, %v1115, %v1170
        %v1173 = vpack.c.bf16 %v1172, %v1172
        %v1174 = vld [vmem:[%s794] sm:$0xf]
        %v1175 = vld [vmem:[%s794 + $0x4] sm:$0xf]
        %v1176 = vld [vmem:[%s794 + $0x8] sm:$0xf]
        %v1177 = vld [vmem:[%s794 + $0xc] sm:$0xf]
        %v1178 = vld [vmem:[%s797] sm:$0x1]
        %v1180 = vlaneseq
        %v1181 = vshrl.u32 %v1180, 7
        %v1182 = vsub.s32 0, %v1181
        %v1183 = vrot.slane %v1178, %v1182
        %v1189 = vunpack.c.l.b16 %v1174
        %v1190 = vunpack.c.l.b16 %v1175
        %v1191 = vunpack.c.l.b16 %v1176
        %v1192 = vunpack.c.l.b16 %v1177
        %v1193 = vpack.c.b16 %v1190, %v1189
        %v1194 = vpack.c.b16 %v1192, %v1191
        %v1198 = vsel %vm890, %v1173, 0
        %1200 = vmatprep.subr.bf16.mxu0 0
        %1201 = vmatpush1.bf16.msra.mxu0 %v1193
        %1202 = vmatprep.subr.bf16.mxu0 0
        %1203 = vmatpush1.bf16.msra.mxu0 %v1194
        %1204 = vmatprep.subr.bf16.mxu0 0
        %1205 = vmatpush1.bf16.msra.mxu0 0
        %1206 = vmatprep.subr.bf16.mxu0 0
        %1207 = vmatpush1.bf16.msra.mxu0 0
        %1208 = vmatprep.subr.bf16.mxu0 0
        %1209 = vmatpush1.bf16.msra.mxu0 0
        %1210 = vmatprep.subr.bf16.mxu0 0
        %1211 = vmatpush1.bf16.msra.mxu0 0
        %1212 = vmatprep.subr.bf16.mxu0 0
        %1213 = vmatpush1.bf16.msra.mxu0 0
        %1214 = vmatprep.subr.bf16.mxu0 0
        %1215 = vmatpush1.bf16.msra.mxu0 0
        %1216 = vmatprep.subr.bf16.mxu0 0
        %1217 = vmatpush1.bf16.msra.mxu0 0
        %1218 = vmatprep.subr.bf16.mxu0 0
        %1219 = vmatpush1.bf16.msra.mxu0 0
        %1220 = vmatprep.subr.bf16.mxu0 0
        %1221 = vmatpush1.bf16.msra.mxu0 0
        %1222 = vmatprep.subr.bf16.mxu0 0
        %1223 = vmatpush1.bf16.msra.mxu0 0
        %1224 = vmatprep.subr.bf16.mxu0 0
        %1225 = vmatpush1.bf16.msra.mxu0 0
        %1226 = vmatprep.subr.bf16.mxu0 0
        %1227 = vmatpush1.bf16.msra.mxu0 0
        %1228 = vmatprep.subr.bf16.mxu0 0
        %1229 = vmatpush1.bf16.msra.mxu0 0
        %1230 = vmatprep.subr.bf16.mxu0 0
        %1231 = vmatpush1.bf16.msra.mxu0 0
        %1232 = vmatprep.mubr.bf16.mxu0 0
        %1233 = vmatmul.mubr.bf16.gmra.mrb[0].mxu0 %v1198
        %v1234 = vpop.f32.mrb[0].mxu0
        %v1235 = vadd.f32 %v1183, %v1234
        %v1236 = vpop.f32.mrb[0].mxu0
        %v1237 = vpop.f32.mrb[0].mxu0
        %v1238 = vpop.f32.mrb[0].mxu0
        %1239 = vdwg.mxu0
        %v1240 = vadd.f32 %v864, %v1235
        %v1241 = vld [vmem:[%s800] sm:$0x1]
        %v1242 = vld [vmem:[%s803] sm:$0x1]
        %v1243 = vsel %vm890, %v1240, 0.0
        %1244 = vadd.xlane.f32.xlu0 %v1243
        %v1245 = vpop.xlane.xlu0 %1244
        %v1246 = vrcp.pop 32.0
        %v1247 = vmul.f32 %v1245, %v1246
        %v1248 = vsub.f32 %v1240, %v1247
        %v1249 = vmul.f32 %v1248, %v1248
        %v1250 = vsel %vm890, %v1249, 0.0
        %1251 = vadd.xlane.f32.xlu0 %v1250
        %v1252 = vpop.xlane.xlu0 %1251
        %v1253 = vmul.f32 %v1252, %v1246
        %v1254 = vadd.f32 %v1253, 1e-12
        %v1255 = vrsqrt.pop %v1254
        %v1256 = vmul.f32 %v1248, %v1255
        %v1258 = vlaneseq
        %v1259 = vshrl.u32 %v1258, 7
        %v1260 = vsub.s32 0, %v1259
        %v1261 = vrot.slane %v1241, %v1260
        %v1263 = vmul.f32 %v1256, %v1261
        %v1265 = vlaneseq
        %v1266 = vshrl.u32 %v1265, 7
        %v1267 = vsub.s32 0, %v1266
        %v1268 = vrot.slane %v1242, %v1267
        %v1270 = vadd.f32 %v1263, %v1268
        %v1271 = vpack.c.bf16 %v1270, %v1270
        %v1272 = vld [vmem:[%s808] sm:$0xf]
        %v1273 = vld [vmem:[%s808 + $0x4] sm:$0xf]
        %v1274 = vld [vmem:[%s808 + $0x8] sm:$0xf]
        %v1275 = vld [vmem:[%s808 + $0xc] sm:$0xf]
        %v1276 = vld [vmem:[%s811] sm:$0x1]
        %v1278 = vlaneseq
        %v1279 = vshrl.u32 %v1278, 7
        %v1280 = vsub.s32 0, %v1279
        %v1281 = vrot.slane %v1276, %v1280
        %v1287 = vunpack.c.l.b16 %v1272
        %v1288 = vunpack.c.l.b16 %v1273
        %v1289 = vunpack.c.l.b16 %v1274
        %v1290 = vunpack.c.l.b16 %v1275
        %v1291 = vpack.c.b16 %v1288, %v1287
        %v1292 = vpack.c.b16 %v1290, %v1289
        %v1296 = vsel %vm890, %v1271, 0
        %1298 = vmatprep.subr.bf16.mxu0 0
        %1299 = vmatpush1.bf16.msra.mxu0 %v1291
        %1300 = vmatprep.subr.bf16.mxu0 0
        %1301 = vmatpush1.bf16.msra.mxu0 %v1292
        %1302 = vmatprep.subr.bf16.mxu0 0
        %1303 = vmatpush1.bf16.msra.mxu0 0
        %1304 = vmatprep.subr.bf16.mxu0 0
        %1305 = vmatpush1.bf16.msra.mxu0 0
        %1306 = vmatprep.subr.bf16.mxu0 0
        %1307 = vmatpush1.bf16.msra.mxu0 0
        %1308 = vmatprep.subr.bf16.mxu0 0
        %1309 = vmatpush1.bf16.msra.mxu0 0
        %1310 = vmatprep.subr.bf16.mxu0 0
        %1311 = vmatpush1.bf16.msra.mxu0 0
        %1312 = vmatprep.subr.bf16.mxu0 0
        %1313 = vmatpush1.bf16.msra.mxu0 0
        %1314 = vmatprep.subr.bf16.mxu0 0
        %1315 = vmatpush1.bf16.msra.mxu0 0
        %1316 = vmatprep.subr.bf16.mxu0 0
        %1317 = vmatpush1.bf16.msra.mxu0 0
        %1318 = vmatprep.subr.bf16.mxu0 0
        %1319 = vmatpush1.bf16.msra.mxu0 0
        %1320 = vmatprep.subr.bf16.mxu0 0
        %1321 = vmatpush1.bf16.msra.mxu0 0
        %1322 = vmatprep.subr.bf16.mxu0 0
        %1323 = vmatpush1.bf16.msra.mxu0 0
        %1324 = vmatprep.subr.bf16.mxu0 0
        %1325 = vmatpush1.bf16.msra.mxu0 0
        %1326 = vmatprep.subr.bf16.mxu0 0
        %1327 = vmatpush1.bf16.msra.mxu0 0
        %1328 = vmatprep.subr.bf16.mxu0 0
        %1329 = vmatpush1.bf16.msra.mxu0 0
        %1330 = vmatprep.mubr.bf16.mxu0 0
        %1331 = vmatmul.mubr.bf16.gmra.mrb[0].mxu0 %v1296
        %v1332 = vpop.f32.mrb[0].mxu0
        %v1333 = vadd.f32 %v1281, %v1332
        %v1334 = vpop.f32.mrb[0].mxu0
        %v1335 = vpop.f32.mrb[0].mxu0
        %v1336 = vpop.f32.mrb[0].mxu0
        %1337 = vdwg.mxu0
        %v1338 = vmul.f32 %v1333, %v1333
        %v1339 = vmul.f32 %v1333, %v1338
        %v1340 = vmul.f32 %v1339, 0.044715
        %v1341 = vadd.f32 %v1333, %v1340
        %v1342 = vmul.f32 %v1341, 0.7978846
        %v1343 = vtanh.pop %v1342
        %v1344 = vadd.f32 %v1343, 1.0
        %v1345 = vmul.f32 %v1344, 0.5
        %v1346 = vmul.f32 %v1333, %v1345
        %v1347 = vpack.c.bf16 %v1346, %v1346
        %v1348 = vld [vmem:[%s816] sm:$0xf]
        %v1349 = vld [vmem:[%s816 + $0x4] sm:$0xf]
        %v1350 = vld [vmem:[%s816 + $0x8] sm:$0xf]
        %v1351 = vld [vmem:[%s816 + $0xc] sm:$0xf]
        %v1352 = vld [vmem:[%s816 + $0x10] sm:$0xf]
        %v1353 = vld [vmem:[%s816 + $0x14] sm:$0xf]
        %v1354 = vld [vmem:[%s816 + $0x18] sm:$0xf]
        %v1355 = vld [vmem:[%s816 + $0x1c] sm:$0xf]
        %v1356 = vld [vmem:[%s819] sm:$0x1]
        %v1358 = vlaneseq
        %v1359 = vshrl.u32 %v1358, 7
        %v1360 = vsub.s32 0, %v1359
        %v1361 = vrot.slane %v1356, %v1360
        %v1371 = vunpack.c.l.b16 %v1348
        %v1372 = vunpack.c.l.b16 %v1349
        %v1373 = vunpack.c.l.b16 %v1350
        %v1374 = vunpack.c.l.b16 %v1351
        %v1375 = vunpack.c.l.b16 %v1352
        %v1376 = vunpack.c.l.b16 %v1353
        %v1377 = vunpack.c.l.b16 %v1354
        %v1378 = vunpack.c.l.b16 %v1355
        %v1379 = vpack.c.b16 %v1372, %v1371
        %v1380 = vpack.c.b16 %v1374, %v1373
        %v1381 = vpack.c.b16 %v1376, %v1375
        %v1382 = vpack.c.b16 %v1378, %v1377
        %vm1387 = vcmask 523264
        %v1389 = vsel %vm1387, %v1347, 0
        %1391 = vmatprep.subr.bf16.mxu0 0
        %1392 = vmatpush1.bf16.msra.mxu0 %v1379
        %1393 = vmatprep.subr.bf16.mxu0 0
        %1394 = vmatpush1.bf16.msra.mxu0 %v1380
        %1395 = vmatprep.subr.bf16.mxu0 0
        %1396 = vmatpush1.bf16.msra.mxu0 %v1381
        %1397 = vmatprep.subr.bf16.mxu0 0
        %1398 = vmatpush1.bf16.msra.mxu0 %v1382
        %1399 = vmatprep.subr.bf16.mxu0 0
        %1400 = vmatpush1.bf16.msra.mxu0 0
        %1401 = vmatprep.subr.bf16.mxu0 0
        %1402 = vmatpush1.bf16.msra.mxu0 0
        %1403 = vmatprep.subr.bf16.mxu0 0
        %1404 = vmatpush1.bf16.msra.mxu0 0
        %1405 = vmatprep.subr.bf16.mxu0 0
        %1406 = vmatpush1.bf16.msra.mxu0 0
        %1407 = vmatprep.subr.bf16.mxu0 0
        %1408 = vmatpush1.bf16.msra.mxu0 0
        %1409 = vmatprep.subr.bf16.mxu0 0
        %1410 = vmatpush1.bf16.msra.mxu0 0
        %1411 = vmatprep.subr.bf16.mxu0 0
        %1412 = vmatpush1.bf16.msra.mxu0 0
        %1413 = vmatprep.subr.bf16.mxu0 0
        %1414 = vmatpush1.bf16.msra.mxu0 0
        %1415 = vmatprep.subr.bf16.mxu0 0
        %1416 = vmatpush1.bf16.msra.mxu0 0
        %1417 = vmatprep.subr.bf16.mxu0 0
        %1418 = vmatpush1.bf16.msra.mxu0 0
        %1419 = vmatprep.subr.bf16.mxu0 0
        %1420 = vmatpush1.bf16.msra.mxu0 0
        %1421 = vmatprep.subr.bf16.mxu0 0
        %1422 = vmatpush1.bf16.msra.mxu0 0
        %1423 = vmatprep.mubr.bf16.mxu0 0
        %1424 = vmatmul.mubr.bf16.gmra.mrb[0].mxu0 %v1389
        %v1425 = vpop.f32.mrb[0].mxu0
        %v1426 = vadd.f32 %v1361, %v1425
        %v1427 = vpop.f32.mrb[0].mxu0
        %v1428 = vpop.f32.mrb[0].mxu0
        %v1429 = vpop.f32.mrb[0].mxu0
        %1430 = vdwg.mxu0
        %v1431 = vadd.f32 %v1270, %v1426
        %v1432 = vld [vmem:[%s822] sm:$0x1]
        %v1433 = vld [vmem:[%s825] sm:$0x1]
        %v1434 = vsel %vm890, %v1431, 0.0
        %1435 = vadd.xlane.f32.xlu0 %v1434
        %v1436 = vpop.xlane.xlu0 %1435
        %v1437 = vmul.f32 %v1436, %v1246
        %v1438 = vsub.f32 %v1431, %v1437
        %v1439 = vmul.f32 %v1438, %v1438
        %v1440 = vsel %vm890, %v1439, 0.0
        %1441 = vadd.xlane.f32.xlu0 %v1440
        %v1442 = vpop.xlane.xlu0 %1441
        %v1443 = vmul.f32 %v1442, %v1246
        %v1444 = vadd.f32 %v1443, 1e-12
        %v1445 = vrsqrt.pop %v1444
        %v1446 = vmul.f32 %v1438, %v1445
        %v1448 = vlaneseq
        %v1449 = vshrl.u32 %v1448, 7
        %v1450 = vsub.s32 0, %v1449
        %v1451 = vrot.slane %v1432, %v1450
        %v1453 = vmul.f32 %v1446, %v1451
        %v1455 = vlaneseq
        %v1456 = vshrl.u32 %v1455, 7
        %v1457 = vsub.s32 0, %v1456
        %v1458 = vrot.slane %v1433, %v1457
        %v1460 = vadd.f32 %v1453, %v1458
        %1461 = vst.msk [vmem:[%s768] sm:$0xff] %vm890, %v1460
        %p1462 = scmp.eq.s32.totalorder %s42, 3
        // Predicated region
        $region97: #{base_encoder_forward.1} parent=91 // pred_check
          %p1463 = pneg %p1462
        $region98: #{base_encoder_forward.1} parent=91 // pred_check_branch
          %1465 = sbr.rel (%p1463) target = $region100
        $region99: #{base_encoder_forward.1} parent=91 // pred_region
          %v1466 = vpack.c.bf16 %v1460, %v1460
          %v1467 = vld [vmem:[%s16] sm:$0xf]
          %v1468 = vld [vmem:[%s16 + $0x4] sm:$0xf]
          %v1469 = vld [vmem:[%s16 + $0x8] sm:$0xf]
          %v1470 = vld [vmem:[%s16 + $0xc] sm:$0xf]
          %v1471 = vld [vmem:[%s17] sm:$0x1]
          %v1476 = vunpack.c.l.b16 %v1467
          %v1477 = vunpack.c.l.b16 %v1468
          %v1478 = vunpack.c.l.b16 %v1469
          %v1479 = vunpack.c.l.b16 %v1470
          %v1480 = vpack.c.b16 %v1477, %v1476
          %v1481 = vpack.c.b16 %v1479, %v1478
          %v1485 = vsel %vm890, %v1466, 0
          %1487 = vmatprep.subr.bf16.mxu0 0
          %1488 = vmatpush1.bf16.msra.mxu0 %v1480
          %1489 = vmatprep.subr.bf16.mxu0 0
          %1490 = vmatpush1.bf16.msra.mxu0 %v1481
          %1491 = vmatprep.subr.bf16.mxu0 0
          %1492 = vmatpush1.bf16.msra.mxu0 0
          %1493 = vmatprep.subr.bf16.mxu0 0
          %1494 = vmatpush1.bf16.msra.mxu0 0
          %1495 = vmatprep.subr.bf16.mxu0 0
          %1496 = vmatpush1.bf16.msra.mxu0 0
          %1497 = vmatprep.subr.bf16.mxu0 0
          %1498 = vmatpush1.bf16.msra.mxu0 0
          %1499 = vmatprep.subr.bf16.mxu0 0
          %1500 = vmatpush1.bf16.msra.mxu0 0
          %1501 = vmatprep.subr.bf16.mxu0 0
          %1502 = vmatpush1.bf16.msra.mxu0 0
          %1503 = vmatprep.subr.bf16.mxu0 0
          %1504 = vmatpush1.bf16.msra.mxu0 0
          %1505 = vmatprep.subr.bf16.mxu0 0
          %1506 = vmatpush1.bf16.msra.mxu0 0
          %1507 = vmatprep.subr.bf16.mxu0 0
          %1508 = vmatpush1.bf16.msra.mxu0 0
          %1509 = vmatprep.subr.bf16.mxu0 0
          %1510 = vmatpush1.bf16.msra.mxu0 0
          %1511 = vmatprep.subr.bf16.mxu0 0
          %1512 = vmatpush1.bf16.msra.mxu0 0
          %1513 = vmatprep.subr.bf16.mxu0 0
          %1514 = vmatpush1.bf16.msra.mxu0 0
          %1515 = vmatprep.subr.bf16.mxu0 0
          %1516 = vmatpush1.bf16.msra.mxu0 0
          %1517 = vmatprep.subr.bf16.mxu0 0
          %1518 = vmatpush1.bf16.msra.mxu0 0
          %1519 = vmatprep.mubr.bf16.mxu0 0
          %1520 = vmatmul.mubr.bf16.gmra.mrb[0].mxu0 %v1485
          %v1521 = vpop.f32.mrb[0].mxu0
          %v1522 = vadd.f32 %v1471, %v1521
          %v1523 = vpop.f32.mrb[0].mxu0
          %v1524 = vpop.f32.mrb[0].mxu0
          %v1525 = vpop.f32.mrb[0].mxu0
          %1526 = vdwg.mxu0
          %v1527 = vtanh.pop %v1522
          %vm1528 = vcmask 253952
          %1529 = vst.msk [vmem:[%s774] sm:$0x1] %vm1528, %v1527
        $region100: #{base_encoder_forward.1} parent=91 // pred_fallthru
          _
        %s1530 = sand.u32 %s505, 1
        %s1531 = scalar_lea.sflag [#allocation3], %s1530
        %s1532 = sand.u32 %s505, 1
        %s1533 = smul.addr %s1532, 8
        %s1534 = scalar_lea.vmem [#allocation2], %s1533
        %s1535 = sand.u32 %s531, 1
        %s1536 = scalar_lea.sflag [#allocation5], %s1535
        %s1537 = sand.u32 %s531, 1
        %s1538 = scalar_lea.vmem [#allocation4], %s1537
        // Predicated region
        $region101: #{base_encoder_forward.1} parent=91 // pred_check
          %p1539 = pneg %p515
        $region102: #{base_encoder_forward.1} parent=91 // pred_check_branch
          %1541 = sbr.rel (%p1539) target = $region104
        $region103: #{base_encoder_forward.1} parent=91 // pred_region
          %s1543 = ssub.s32 128, 128
          %1544 = vsyncadd %s1531, %s1543
          %s1545 = smul.addr %s41, 128
          %s1546 = scalar_lea.hbm %s18, %s1545
          %s1548 = sshll.u32 %s1534, 4
          %s1549 = int_to_ptr.vmem [resolvable:$true] %s1548
          %1551 = dma.vmem_to_hbm [thread:$0]  %s1549, 128, %s1546, %s1531
        $region104: #{base_encoder_forward.1} parent=91 // pred_fallthru
          _
        // Predicated region
        $region105: #{base_encoder_forward.1} parent=91 // pred_check
          %p1552 = pneg %p541
        $region106: #{base_encoder_forward.1} parent=91 // pred_check_branch
          %1554 = sbr.rel (%p1552) target = $region108
        $region107: #{base_encoder_forward.1} parent=91 // pred_region
          %s1556 = ssub.s32 16, 16
          %1557 = vsyncadd %s1536, %s1556
          %s1558 = smul.addr %s41, 16
          %s1559 = scalar_lea.hbm %s19, %s1558
          %s1561 = sshll.u32 %s1538, 4
          %s1562 = int_to_ptr.vmem [resolvable:$true] %s1561
          %1564 = dma.vmem_to_hbm [thread:$0]  %s1562, 16, %s1559, %s1536
        $region108: #{base_encoder_forward.1} parent=91 // pred_fallthru
          _
      $region92: #{base_encoder_forward.1} parent=5 // pred_fallthru
        _
      %p1565 = scmp.le.s32.totalorder 2, %s32
      // Predicated region
      $region109: #{base_encoder_forward.1} parent=5 // pred_check
        %p1566 = pneg %p1565
      $region110: #{base_encoder_forward.1} parent=5 // pred_check_branch
        %1568 = sbr.rel (%p1566) target = $region112
      $region111: #{base_encoder_forward.1} parent=5 // pred_region
        %s1569 = ssub.s32 %s32, 2
        // Predicated region
        $region113: #{base_encoder_forward.1} parent=111 // pred_check
          %p1570 = pneg %p521
        $region114: #{base_encoder_forward.1} parent=111 // pred_check_branch
          %1572 = sbr.rel (%p1570) target = $region116
        $region115: #{base_encoder_forward.1} parent=111 // pred_region
          %s1573 = sand.u32 %s506, 1
          %s1574 = scalar_lea.sflag [#allocation3], %s1573
          %s1575 = sand.u32 %s506, 1
          %s1576 = smul.addr %s1575, 8
          %s1577 = scalar_lea.vmem [#allocation2], %s1576
          %1578 = dma.done %s1574, 128
        $region116: #{base_encoder_forward.1} parent=111 // pred_fallthru
          _
        // Predicated region
        $region117: #{base_encoder_forward.1} parent=111 // pred_check
          %p1579 = pneg %p547
        $region118: #{base_encoder_forward.1} parent=111 // pred_check_branch
          %1581 = sbr.rel (%p1579) target = $region120
        $region119: #{base_encoder_forward.1} parent=111 // pred_region
          %s1582 = sand.u32 %s532, 1
          %s1583 = scalar_lea.sflag [#allocation5], %s1582
          %s1584 = sand.u32 %s532, 1
          %s1585 = scalar_lea.vmem [#allocation4], %s1584
          %1586 = dma.done %s1583, 16
        $region120: #{base_encoder_forward.1} parent=111 // pred_fallthru
          _
      $region112: #{base_encoder_forward.1} parent=5 // pred_fallthru
        _
    $region6: #{base_encoder_forward.1} parent=1 // loop_footer
      %s36 = sadd.s32 1, %s32
    $region7: #{base_encoder_forward.1} parent=1 // loop_footer_branch
      %31 = sbr.rel target = $region3
    $region8: #{base_encoder_forward.1} parent=1 // loop_exit
      _
    %1587 = vsyncpa [#allocation3], 1
    %s1588 = scalar_lea.sflag [#allocation3], 1
    %1589 = vsyncpa %s1588, 1
    %1590 = vsyncpa [#allocation5], 1
    %s1591 = scalar_lea.sflag [#allocation5], 1
    %1592 = vsyncpa %s1591, 1

</llo_original>
